<compile_context>
chip_gen: v6e
topology: v6e:2x2x1
jax: 0.10.0
libtpu: 0.0.40
codegen_flags: <defaults>
</compile_context>

<pallas_src>
import math

import jax
import jax.numpy as jnp
import numpy as np
from jax.experimental import pallas as pl
from jax.experimental.pallas import tpu as pltpu


# --------------------------------------------------------------------------
# Kernel
# --------------------------------------------------------------------------
def attention_kan_kernel(x_ref, wqkv_ref, bqkv_ref, segbc_ref,
                         wfin_ref, bfin_ref, out_ref):
    TB, I = x_ref.shape
    SO = segbc_ref.shape[0]                  # packed width S * O
    D1 = wqkv_ref.shape[0] // (2 * I)        # degree + 1
    S = 2 * D1                               # attention sequence length
    O = SO // S                              # per-position embedding width
    wdt = wqkv_ref.dtype                     # weight dtype (f32 or bf16)

    x = x_ref[...].astype(jnp.float32)
    t = jnp.tanh(x)

    # Monomial feature slab [1, t, .., t^D, g, g*t, .., g*t^D]; the Chebyshev /
    # Hermite-function recurrences are folded into wqkv host-side.
    # TODO(synk): HermiteFuncKANLinear source was not provided; orthonormal
    # Hermite functions of tanh(x) are assumed (mirrored in the reference).
    pows = [jnp.ones_like(t)]
    if D1 > 1:
        pows.append(t)
    for _ in range(2, D1):
        pows.append(pows[-1] * t)
    g = (math.pi ** -0.25) * jnp.exp(-0.5 * t * t)
    basis = jnp.concatenate(pows + [p * g for p in pows], axis=-1)   # (TB, 2*D1*I)

    # Fused (subspace projection o q/k/v projection): a single matmul.
    qkv = jnp.dot(basis.astype(wdt), wqkv_ref[...],
                  preferred_element_type=jnp.float32) + bqkv_ref[...]
    q = qkv[:, :SO]
    k = qkv[:, SO:2 * SO]
    v = qkv[:, 2 * SO:]

    # (SO, SO) block-diagonal of ones((O,O)): per-group lane sum + broadcast.
    segbc = segbc_ref[...]

    # Single-head attention over S positions, flash-style over relative
    # offsets d.  roll(k, d*O) aligns key position (s-d) mod S with lane group
    # s; applying the SAME roll to v keeps q/k/v alignment consistent, so the
    # result is independent of the roll direction convention.  Every
    # intermediate is a lane-dense (TB, SO) tile.
    s_bc = jnp.dot(q * k, segbc, preferred_element_type=jnp.float32)   # d = 0
    m = s_bc
    denom = jnp.ones_like(s_bc)            # exp(0), broadcast over the group
    ctx = v
    for d in range(1, S):
        rk = pltpu.roll(k, d * O, axis=1)
        rv = pltpu.roll(v, d * O, axis=1)
        s_bc = jnp.dot(q * rk, segbc, preferred_element_type=jnp.float32)
        m_new = jnp.maximum(m, s_bc)
        alpha = jnp.exp(m - m_new)
        p = jnp.exp(s_bc - m_new)
        denom = alpha * denom + p
        ctx = alpha * ctx + p * rv
        m = m_new
    ctx = ctx * pl.reciprocal(denom)       # exact; denom >= 1

    # Out-projection + einsum('bid,iod->bo') folded into one matmul whose
    # output columns are zero-padded to a lane-dense 128-wide slab.
    out = jnp.dot(ctx.astype(wdt), wfin_ref[...],
                  preferred_element_type=jnp.float32) + bfin_ref[...]
    out_ref[...] = out.astype(out_ref.dtype)


# --------------------------------------------------------------------------
# Parameters (test initialisation mirroring the PyTorch module)
# --------------------------------------------------------------------------
def make_params(key, input_dim, output_dim, degree):
    D1 = degree + 1
    S = 2 * D1
    ks = jax.random.split(key, 7)
    std_sub = 1.0 / (input_dim * D1)
    cheby_coeffs = std_sub * jax.random.normal(
        ks[0], (input_dim, output_dim, D1), jnp.float32)
    herm_coeffs = std_sub * jax.random.normal(
        ks[1], (input_dim, output_dim, D1), jnp.float32)
    in_proj_w = (1.0 / math.sqrt(output_dim)) * jax.random.normal(
        ks[2], (3 * output_dim, output_dim), jnp.float32)
    in_proj_b = 0.1 * jax.random.normal(ks[3], (3 * output_dim,), jnp.float32)
    out_proj_w = (1.0 / math.sqrt(output_dim)) * jax.random.normal(
        ks[4], (output_dim, output_dim), jnp.float32)
    out_proj_b = 0.1 * jax.random.normal(ks[5], (output_dim,), jnp.float32)
    std_c = 1.0 / (output_dim * D1 * 2)
    coeffs = std_c * jax.random.normal(
        ks[6], (output_dim, output_dim, S), jnp.float32)
    return dict(cheby_coeffs=cheby_coeffs, herm_coeffs=herm_coeffs,
                in_proj_w=in_proj_w, in_proj_b=in_proj_b,
                out_proj_w=out_proj_w, out_proj_b=out_proj_b,
                coeffs=coeffs)


# --------------------------------------------------------------------------
# One-time host-side weight packing / algebraic folding
# --------------------------------------------------------------------------
def _round_up(n, m):
    return ((n + m - 1) // m) * m


def _cheby_monomial_coeffs(D1):
    """C[s, j]: coefficient of t^j in T_s(t)."""
    C = np.zeros((D1, D1), np.float64)
    C[0, 0] = 1.0
    if D1 > 1:
        C[1, 1] = 1.0
    for d in range(2, D1):
        C[d, 1:] += 2.0 * C[d - 1, :-1]
        C[d, :] -= C[d - 2, :]
    return C


def _hermite_monomial_coeffs(D1):
    """H[s, j]: psi_s(t) = sum_j H[s, j] * t^j * g(t) (orthonormal Hermite fns)."""
    H = np.zeros((D1, D1), np.float64)
    H[0, 0] = 1.0
    if D1 > 1:
        H[1, 1] = math.sqrt(2.0)
    for n in range(1, D1 - 1):
        H[n + 1, 1:] += math.sqrt(2.0 / (n + 1)) * H[n, :-1]
        H[n + 1, :] -= math.sqrt(n / (n + 1)) * H[n - 1, :]
    return H


def prepare_packed_params(params, input_dim, output_dim, degree,
                          dtype=jnp.float32):
    D1 = degree + 1
    S = 2 * D1
    I = input_dim
    O = output_dim
    SO = S * O
    O_pad = _round_up(max(O, 1), 128)

    cheb_c = np.asarray(params['cheby_coeffs'], np.float32)   # (I, O, D1)
    herm_c = np.asarray(params['herm_coeffs'], np.float32)    # (I, O, D1)
    in_w = np.asarray(params['in_proj_w'], np.float32)        # (3O, O)
    in_b = np.asarray(params['in_proj_b'], np.float32)        # (3O,)
    out_w = np.asarray(params['out_proj_w'], np.float32)      # (O, O)
    out_b = np.asarray(params['out_proj_b'], np.float32)      # (O,)
    coeffs = np.asarray(params['coeffs'], np.float32)         # (O, O, S)

    # Chebyshev / Hermite recurrences folded into the subspace weights via a
    # monomial change of basis (kernel computes [t^j, g*t^j] only).
    C = _cheby_monomial_coeffs(D1)
    H = _hermite_monomial_coeffs(D1)
    w_sub = np.zeros((2 * D1 * I, SO), np.float32)
    for s in range(D1):
        for j in range(D1):
            if C[s, j] != 0.0:
                w_sub[j * I:(j + 1) * I, s * O:(s + 1) * O] += \
                    np.float32(C[s, j]) * cheb_c[:, :, s]
            if H[s, j] != 0.0:
                w_sub[(D1 + j) * I:(D1 + j + 1) * I,
                      (D1 + s) * O:(D1 + s + 1) * O] += \
                    np.float32(H[s, j]) * herm_c[:, :, s]

    # Fused q/k/v projection folded through the subspace projection
    # (1/sqrt(O) folded into Wq and bq).
    scale = 1.0 / math.sqrt(O)
    wq, wk, wv = in_w[:O] * scale, in_w[O:2 * O], in_w[2 * O:]
    bq, bk, bv = in_b[:O] * scale, in_b[O:2 * O], in_b[2 * O:]
    eye_s = np.eye(S, dtype=np.float32)
    w_qkv = np.concatenate([np.kron(eye_s, wq.T),
                            np.kron(eye_s, wk.T),
                            np.kron(eye_s, wv.T)], axis=1)     # (SO, 3*SO)
    w_qkv_fold = w_sub @ w_qkv                                 # (2*D1*I, 3*SO)
    b_qkv = np.concatenate([np.tile(bq, S), np.tile(bk, S),
                            np.tile(bv, S)])[None, :]          # (1, 3*SO)

    # Attention out-projection folded into the final einsum; lane-dense pad.
    c_pk = np.transpose(coeffs, (2, 0, 1)).reshape(SO, O)      # (SO, O)
    w_final = np.kron(eye_s, out_w.T) @ c_pk                   # (SO, O)
    b_final = np.tile(out_b, S)[None, :] @ c_pk                # (1, O)
    w_final_pad = np.zeros((SO, O_pad), np.float32)
    w_final_pad[:, :O] = w_final
    b_final_pad = np.zeros((1, O_pad), np.float32)
    b_final_pad[:, :O] = b_final

    # Within-group lane-sum + broadcast matrix (kept in f32).
    grp = np.arange(SO) // O
    seg_bc = (grp[:, None] == grp[None, :]).astype(np.float32)  # (SO, SO)

    return dict(w_qkv=jnp.asarray(w_qkv_fold, dtype),
                b_qkv=jnp.asarray(b_qkv, jnp.float32),
                seg_bc=jnp.asarray(seg_bc, jnp.float32),
                w_final=jnp.asarray(w_final_pad, dtype),
                b_final=jnp.asarray(b_final_pad, jnp.float32))


# --------------------------------------------------------------------------
# Wrapper
# --------------------------------------------------------------------------
def attention_kan_linear(x, packed, input_dim, output_dim, degree,
                         block_b=1024):
    """Forward pass.  `packed` comes from prepare_packed_params (built once)."""
    D1 = degree + 1
    S = 2 * D1
    SO = S * output_dim
    O_pad = packed['w_final'].shape[1]

    xb = x.reshape(-1, input_dim).astype(jnp.float32)   # torch.reshape(x, (-1, I))
    B = xb.shape[0]

    # Batch tile: multiple of 8; split so the grid has >= 2 steps when the
    # batch allows it (both v7x TensorCores get work).
    TB = min(block_b, _round_up(B, 8))
    TB = max(8, (TB // 8) * 8)
    if _round_up(B, 8) <= TB and B >= 16:
        TB = max(8, _round_up((B + 1) // 2, 8))
    Bp = _round_up(B, TB)
    if Bp != B:
        xb = jnp.pad(xb, ((0, Bp - B), (0, 0)))          # zero rows, dropped later
    grid = (Bp // TB,)

    weights = (packed['w_qkv'], packed['b_qkv'], packed['seg_bc'],
               packed['w_final'], packed['b_final'])

    def resident(arr):
        # tiny weight, kept VMEM-resident across the whole grid
        return pl.BlockSpec(arr.shape, lambda i, nd=arr.ndim: (0,) * nd)

    flops = 2 * Bp * (2 * D1 * input_dim * 3 * SO    # fused basis->qkv matmul
                      + S * SO * SO                  # score sum+broadcast matmuls
                      + SO * O_pad)                  # folded out-proj + einsum
    transcendentals = Bp * (2 * input_dim + (2 * S - 1) * SO)
    bytes_accessed = 4 * Bp * (input_dim + O_pad) + sum(
        int(np.prod(w.shape)) * w.dtype.itemsize for w in weights)

    out = pl.pallas_call(
        attention_kan_kernel,
        out_shape=jax.ShapeDtypeStruct((Bp, O_pad), jnp.float32),
        grid=grid,
        in_specs=[pl.BlockSpec((TB, input_dim), lambda i: (i, 0))]
                 + [resident(w) for w in weights],
        out_specs=pl.BlockSpec((TB, O_pad), lambda i: (i, 0)),
        compiler_params=pltpu.CompilerParams(
            dimension_semantics=("parallel",),
            vmem_limit_bytes=32 * 1024 * 1024),
        cost_estimate=pl.CostEstimate(
            flops=int(flops),
            transcendentals=int(transcendentals),
            bytes_accessed=int(bytes_accessed)),
    )(xb, *weights)
    return out[:B, :output_dim]                        # == x.view(-1, outdim)


# --------------------------------------------------------------------------
# Pure-JAX reference (mirrors the PyTorch module math, unfused)
# --------------------------------------------------------------------------
def reference_forward(x, params, input_dim, output_dim, degree):
    D1 = degree + 1
    xb = x.reshape(-1, input_dim).astype(jnp.float32)
    t = jnp.tanh(xb)
    cheb = [jnp.ones_like(t)]
    if D1 > 1:
        cheb.append(t)
    for _ in range(2, D1):
        cheb.append(2.0 * t * cheb[-1] - cheb[-2])
    cheb = jnp.stack(cheb, axis=-1)                      # (B, I, D1)
    g = (math.pi ** -0.25) * jnp.exp(-0.5 * t * t)
    herm = [g]
    if D1 > 1:
        herm.append(math.sqrt(2.0) * t * g)
    for n in range(1, D1 - 1):
        herm.append(math.sqrt(2.0 / (n + 1)) * t * herm[-1]
                    - math.sqrt(n / (n + 1)) * herm[-2])
    herm = jnp.stack(herm, axis=-1)                      # (B, I, D1)

    c_out = jnp.einsum('bid,iod->bod', cheb, params['cheby_coeffs'])
    h_out = jnp.einsum('bid,iod->bod', herm, params['herm_coeffs'])
    y = jnp.concatenate([c_out, h_out], axis=-1)         # (B, O, S)
    y = jnp.transpose(y, (0, 2, 1))                      # (B, S, O)

    O = output_dim
    wq, wk, wv = (params['in_proj_w'][:O], params['in_proj_w'][O:2 * O],
                  params['in_proj_w'][2 * O:])
    bq, bk, bv = (params['in_proj_b'][:O], params['in_proj_b'][O:2 * O],
                  params['in_proj_b'][2 * O:])
    q = y @ wq.T + bq
    k = y @ wk.T + bk
    v = y @ wv.T + bv
    scores = jnp.einsum('bso,bto->bst', q, k) / math.sqrt(O)
    attn = jax.nn.softmax(scores, axis=-1)
    ctx = jnp.einsum('bst,bto->bso', attn, v)
    o = ctx @ params['out_proj_w'].T + params['out_proj_b']
    o = jnp.transpose(o, (0, 2, 1))                      # (B, O, S)
    return jnp.einsum('bid,iod->bo', o, params['coeffs'])


# --------------------------------------------------------------------------
if __name__ == "__main__":
    input_dim, output_dim, degree = 8, 16, 3     # S*O = 2*(degree+1)*16 = 128 lanes
    key = jax.random.PRNGKey(0)
    kx, kp = jax.random.split(key)

    # the module flattens everything but the last dim: B = 2*4*8 = 64 rows
    x = jax.random.normal(kx, (2, 4, 8, input_dim), jnp.float32)
    params = make_params(kp, input_dim, output_dim, degree)
    packed = prepare_packed_params(params, input_dim, output_dim, degree)

    y = attention_kan_linear(x, packed, input_dim, output_dim, degree)
    jax.block_until_ready(y)
    y_ref = reference_forward(x, params, input_dim, output_dim, degree)
    assert y.shape == (2 * 4 * 8, output_dim)
    assert np.all(np.isfinite(np.asarray(y)))
    np.testing.assert_allclose(np.asarray(y), np.asarray(y_ref),
                               rtol=1e-2, atol=2e-3)

    # batch not divisible by the tile -> exercises the padding path
    x2 = jax.random.normal(jax.random.PRNGKey(1), (5, 3, input_dim), jnp.float32)
    y2 = attention_kan_linear(x2, packed, input_dim, output_dim, degree)
    jax.block_until_ready(y2)
    y2_ref = reference_forward(x2, params, input_dim, output_dim, degree)
    np.testing.assert_allclose(np.asarray(y2), np.asarray(y2_ref),
                               rtol=1e-2, atol=2e-3)

    # bf16 MXU weights with f32 accumulation (v6e / v7x fast path)
    packed_bf16 = prepare_packed_params(params, input_dim, output_dim, degree,
                                        dtype=jnp.bfloat16)
    y3 = attention_kan_linear(x, packed_bf16, input_dim, output_dim, degree)
    jax.block_until_ready(y3)
    assert np.all(np.isfinite(np.asarray(y3)))
    np.testing.assert_allclose(np.asarray(y3), np.asarray(y_ref),
                               rtol=1e-1, atol=1e-2)

    print("KERNEL_OK")
</pallas_src>

<mosaic_0001>
module attributes {stable_mosaic.version = 11 : i64} {
  func.func @attention_kan_kernel(%arg0: i32, %arg1: memref<32x8xf32, #tpu.memory_space<vmem>>, %arg2: memref<64x384xf32, #tpu.memory_space<vmem>>, %arg3: memref<1x384xf32, #tpu.memory_space<vmem>>, %arg4: memref<128x128xf32, #tpu.memory_space<vmem>>, %arg5: memref<128x128xf32, #tpu.memory_space<vmem>>, %arg6: memref<1x128xf32, #tpu.memory_space<vmem>>, %arg7: memref<32x128xf32, #tpu.memory_space<vmem>>) attributes {dimension_semantics = [#tpu.dimension_semantics<parallel>], iteration_bounds = array<i64: 2>, scalar_prefetch = 0 : i64, scratch_operands = 0 : i64, tpu.core_type = #tpu.core_type<tc>, window_params = [{transform_indices = @transform_0, window_bounds = array<i64: 32, 8>}, {pipeline_mode = #tpu.pipeline_mode<synchronous>, transform_indices = @transform_1, window_bounds = array<i64: 64, 384>}, {pipeline_mode = #tpu.pipeline_mode<synchronous>, transform_indices = @transform_2, window_bounds = array<i64: 1, 384>}, {pipeline_mode = #tpu.pipeline_mode<synchronous>, transform_indices = @transform_3, window_bounds = array<i64: 128, 128>}, {pipeline_mode = #tpu.pipeline_mode<synchronous>, transform_indices = @transform_4, window_bounds = array<i64: 128, 128>}, {pipeline_mode = #tpu.pipeline_mode<synchronous>, transform_indices = @transform_5, window_bounds = array<i64: 1, 128>}, {transform_indices = @transform_6, window_bounds = array<i64: 32, 128>}]} {
    %c0 = arith.constant 0 : index
    %c0_0 = arith.constant 0 : index
    %0 = vector.load %arg1[%c0, %c0_0] : memref<32x8xf32, #tpu.memory_space<vmem>>, vector<32x8xf32>
    %1 = math.tanh %0 : vector<32x8xf32>
    %cst = arith.constant 1.000000e+00 : f32
    %2 = vector.broadcast %cst : f32 to vector<32x8xf32>
    %3 = arith.mulf %1, %1 : vector<32x8xf32>
    %4 = arith.mulf %3, %1 : vector<32x8xf32>
    %cst_1 = arith.constant -5.000000e-01 : f32
    %5 = vector.broadcast %cst_1 : f32 to vector<32x8xf32>
    %6 = arith.mulf %5, %1 : vector<32x8xf32>
    %7 = arith.mulf %6, %1 : vector<32x8xf32>
    %8 = math.exp %7 : vector<32x8xf32>
    %cst_2 = arith.constant 0.751125574 : f32
    %9 = vector.broadcast %cst_2 : f32 to vector<32x8xf32>
    %10 = arith.mulf %9, %8 : vector<32x8xf32>
    %11 = arith.mulf %2, %10 : vector<32x8xf32>
    %12 = arith.mulf %1, %10 : vector<32x8xf32>
    %13 = arith.mulf %3, %10 : vector<32x8xf32>
    %14 = arith.mulf %4, %10 : vector<32x8xf32>
    %15 = tpu.concatenate %2, %1, %3, %4, %11, %12, %13, %14 in 1 : vector<32x8xf32>, vector<32x8xf32>, vector<32x8xf32>, vector<32x8xf32>, vector<32x8xf32>, vector<32x8xf32>, vector<32x8xf32>, vector<32x8xf32> -> vector<32x64xf32>
    %c0_3 = arith.constant 0 : index
    %c0_4 = arith.constant 0 : index
    %16 = vector.load %arg2[%c0_3, %c0_4] : memref<64x384xf32, #tpu.memory_space<vmem>>, vector<64x384xf32>
    %cst_5 = arith.constant dense<0.000000e+00> : vector<32x384xf32>
    %17 = tpu.matmul %15, %16, %cst_5 {dimension_numbers = #tpu.dot_dimension_numbers<[1], [0], [0], [1], [0, 0, 1, 1], [], []>} : vector<32x64xf32>, vector<64x384xf32>, vector<32x384xf32> -> vector<32x384xf32>
    %c0_6 = arith.constant 0 : index
    %c0_7 = arith.constant 0 : index
    %18 = vector.load %arg3[%c0_6, %c0_7] : memref<1x384xf32, #tpu.memory_space<vmem>>, vector<1x384xf32>
    %19 = vector.broadcast %18 : vector<1x384xf32> to vector<32x384xf32>
    %20 = arith.addf %17, %19 : vector<32x384xf32>
    %21 = vector.extract_strided_slice %20 {offsets = [0, 0], sizes = [32, 128], strides = [1, 1]} : vector<32x384xf32> to vector<32x128xf32>
    %22 = vector.extract_strided_slice %20 {offsets = [0, 128], sizes = [32, 128], strides = [1, 1]} : vector<32x384xf32> to vector<32x128xf32>
    %23 = vector.extract_strided_slice %20 {offsets = [0, 256], sizes = [32, 128], strides = [1, 1]} : vector<32x384xf32> to vector<32x128xf32>
    %c0_8 = arith.constant 0 : index
    %c0_9 = arith.constant 0 : index
    %24 = vector.load %arg4[%c0_8, %c0_9] : memref<128x128xf32, #tpu.memory_space<vmem>>, vector<128x128xf32>
    %25 = arith.mulf %21, %22 : vector<32x128xf32>
    %cst_10 = arith.constant dense<0.000000e+00> : vector<32x128xf32>
    %26 = tpu.matmul %25, %24, %cst_10 {dimension_numbers = #tpu.dot_dimension_numbers<[1], [0], [0], [1], [0, 0, 1, 1], [], []>} : vector<32x128xf32>, vector<128x128xf32>, vector<32x128xf32> -> vector<32x128xf32>
    %cst_11 = arith.constant 1.000000e+00 : f32
    %27 = vector.broadcast %cst_11 : f32 to vector<32x128xf32>
    %c16_i32 = arith.constant 16 : i32
    %28 = tpu.dynamic_rotate %22 by %c16_i32 dim 1 : vector<32x128xf32>, i32 -> vector<32x128xf32>
    %c16_i32_12 = arith.constant 16 : i32
    %29 = tpu.dynamic_rotate %23 by %c16_i32_12 dim 1 : vector<32x128xf32>, i32 -> vector<32x128xf32>
    %30 = arith.mulf %21, %28 : vector<32x128xf32>
    %cst_13 = arith.constant dense<0.000000e+00> : vector<32x128xf32>
    %31 = tpu.matmul %30, %24, %cst_13 {dimension_numbers = #tpu.dot_dimension_numbers<[1], [0], [0], [1], [0, 0, 1, 1], [], []>} : vector<32x128xf32>, vector<128x128xf32>, vector<32x128xf32> -> vector<32x128xf32>
    %32 = arith.maximumf %26, %31 : vector<32x128xf32>
    %33 = arith.subf %26, %32 : vector<32x128xf32>
    %34 = math.exp %33 : vector<32x128xf32>
    %35 = arith.subf %31, %32 : vector<32x128xf32>
    %36 = math.exp %35 : vector<32x128xf32>
    %37 = arith.mulf %34, %27 : vector<32x128xf32>
    %38 = arith.addf %37, %36 : vector<32x128xf32>
    %39 = arith.mulf %34, %23 : vector<32x128xf32>
    %40 = arith.mulf %36, %29 : vector<32x128xf32>
    %41 = arith.addf %39, %40 : vector<32x128xf32>
    %c32_i32 = arith.constant 32 : i32
    %42 = tpu.dynamic_rotate %22 by %c32_i32 dim 1 : vector<32x128xf32>, i32 -> vector<32x128xf32>
    %c32_i32_14 = arith.constant 32 : i32
    %43 = tpu.dynamic_rotate %23 by %c32_i32_14 dim 1 : vector<32x128xf32>, i32 -> vector<32x128xf32>
    %44 = arith.mulf %21, %42 : vector<32x128xf32>
    %cst_15 = arith.constant dense<0.000000e+00> : vector<32x128xf32>
    %45 = tpu.matmul %44, %24, %cst_15 {dimension_numbers = #tpu.dot_dimension_numbers<[1], [0], [0], [1], [0, 0, 1, 1], [], []>} : vector<32x128xf32>, vector<128x128xf32>, vector<32x128xf32> -> vector<32x128xf32>
    %46 = arith.maximumf %32, %45 : vector<32x128xf32>
    %47 = arith.subf %32, %46 : vector<32x128xf32>
    %48 = math.exp %47 : vector<32x128xf32>
    %49 = arith.subf %45, %46 : vector<32x128xf32>
    %50 = math.exp %49 : vector<32x128xf32>
    %51 = arith.mulf %48, %38 : vector<32x128xf32>
    %52 = arith.addf %51, %50 : vector<32x128xf32>
    %53 = arith.mulf %48, %41 : vector<32x128xf32>
    %54 = arith.mulf %50, %43 : vector<32x128xf32>
    %55 = arith.addf %53, %54 : vector<32x128xf32>
    %c48_i32 = arith.constant 48 : i32
    %56 = tpu.dynamic_rotate %22 by %c48_i32 dim 1 : vector<32x128xf32>, i32 -> vector<32x128xf32>
    %c48_i32_16 = arith.constant 48 : i32
    %57 = tpu.dynamic_rotate %23 by %c48_i32_16 dim 1 : vector<32x128xf32>, i32 -> vector<32x128xf32>
    %58 = arith.mulf %21, %56 : vector<32x128xf32>
    %cst_17 = arith.constant dense<0.000000e+00> : vector<32x128xf32>
    %59 = tpu.matmul %58, %24, %cst_17 {dimension_numbers = #tpu.dot_dimension_numbers<[1], [0], [0], [1], [0, 0, 1, 1], [], []>} : vector<32x128xf32>, vector<128x128xf32>, vector<32x128xf32> -> vector<32x128xf32>
    %60 = arith.maximumf %46, %59 : vector<32x128xf32>
    %61 = arith.subf %46, %60 : vector<32x128xf32>
    %62 = math.exp %61 : vector<32x128xf32>
    %63 = arith.subf %59, %60 : vector<32x128xf32>
    %64 = math.exp %63 : vector<32x128xf32>
    %65 = arith.mulf %62, %52 : vector<32x128xf32>
    %66 = arith.addf %65, %64 : vector<32x128xf32>
    %67 = arith.mulf %62, %55 : vector<32x128xf32>
    %68 = arith.mulf %64, %57 : vector<32x128xf32>
    %69 = arith.addf %67, %68 : vector<32x128xf32>
    %c64_i32 = arith.constant 64 : i32
    %70 = tpu.dynamic_rotate %22 by %c64_i32 dim 1 : vector<32x128xf32>, i32 -> vector<32x128xf32>
    %c64_i32_18 = arith.constant 64 : i32
    %71 = tpu.dynamic_rotate %23 by %c64_i32_18 dim 1 : vector<32x128xf32>, i32 -> vector<32x128xf32>
    %72 = arith.mulf %21, %70 : vector<32x128xf32>
    %cst_19 = arith.constant dense<0.000000e+00> : vector<32x128xf32>
    %73 = tpu.matmul %72, %24, %cst_19 {dimension_numbers = #tpu.dot_dimension_numbers<[1], [0], [0], [1], [0, 0, 1, 1], [], []>} : vector<32x128xf32>, vector<128x128xf32>, vector<32x128xf32> -> vector<32x128xf32>
    %74 = arith.maximumf %60, %73 : vector<32x128xf32>
    %75 = arith.subf %60, %74 : vector<32x128xf32>
    %76 = math.exp %75 : vector<32x128xf32>
    %77 = arith.subf %73, %74 : vector<32x128xf32>
    %78 = math.exp %77 : vector<32x128xf32>
    %79 = arith.mulf %76, %66 : vector<32x128xf32>
    %80 = arith.addf %79, %78 : vector<32x128xf32>
    %81 = arith.mulf %76, %69 : vector<32x128xf32>
    %82 = arith.mulf %78, %71 : vector<32x128xf32>
    %83 = arith.addf %81, %82 : vector<32x128xf32>
    %c80_i32 = arith.constant 80 : i32
    %84 = tpu.dynamic_rotate %22 by %c80_i32 dim 1 : vector<32x128xf32>, i32 -> vector<32x128xf32>
    %c80_i32_20 = arith.constant 80 : i32
    %85 = tpu.dynamic_rotate %23 by %c80_i32_20 dim 1 : vector<32x128xf32>, i32 -> vector<32x128xf32>
    %86 = arith.mulf %21, %84 : vector<32x128xf32>
    %cst_21 = arith.constant dense<0.000000e+00> : vector<32x128xf32>
    %87 = tpu.matmul %86, %24, %cst_21 {dimension_numbers = #tpu.dot_dimension_numbers<[1], [0], [0], [1], [0, 0, 1, 1], [], []>} : vector<32x128xf32>, vector<128x128xf32>, vector<32x128xf32> -> vector<32x128xf32>
    %88 = arith.maximumf %74, %87 : vector<32x128xf32>
    %89 = arith.subf %74, %88 : vector<32x128xf32>
    %90 = math.exp %89 : vector<32x128xf32>
    %91 = arith.subf %87, %88 : vector<32x128xf32>
    %92 = math.exp %91 : vector<32x128xf32>
    %93 = arith.mulf %90, %80 : vector<32x128xf32>
    %94 = arith.addf %93, %92 : vector<32x128xf32>
    %95 = arith.mulf %90, %83 : vector<32x128xf32>
    %96 = arith.mulf %92, %85 : vector<32x128xf32>
    %97 = arith.addf %95, %96 : vector<32x128xf32>
    %c96_i32 = arith.constant 96 : i32
    %98 = tpu.dynamic_rotate %22 by %c96_i32 dim 1 : vector<32x128xf32>, i32 -> vector<32x128xf32>
    %c96_i32_22 = arith.constant 96 : i32
    %99 = tpu.dynamic_rotate %23 by %c96_i32_22 dim 1 : vector<32x128xf32>, i32 -> vector<32x128xf32>
    %100 = arith.mulf %21, %98 : vector<32x128xf32>
    %cst_23 = arith.constant dense<0.000000e+00> : vector<32x128xf32>
    %101 = tpu.matmul %100, %24, %cst_23 {dimension_numbers = #tpu.dot_dimension_numbers<[1], [0], [0], [1], [0, 0, 1, 1], [], []>} : vector<32x128xf32>, vector<128x128xf32>, vector<32x128xf32> -> vector<32x128xf32>
    %102 = arith.maximumf %88, %101 : vector<32x128xf32>
    %103 = arith.subf %88, %102 : vector<32x128xf32>
    %104 = math.exp %103 : vector<32x128xf32>
    %105 = arith.subf %101, %102 : vector<32x128xf32>
    %106 = math.exp %105 : vector<32x128xf32>
    %107 = arith.mulf %104, %94 : vector<32x128xf32>
    %108 = arith.addf %107, %106 : vector<32x128xf32>
    %109 = arith.mulf %104, %97 : vector<32x128xf32>
    %110 = arith.mulf %106, %99 : vector<32x128xf32>
    %111 = arith.addf %109, %110 : vector<32x128xf32>
    %c112_i32 = arith.constant 112 : i32
    %112 = tpu.dynamic_rotate %22 by %c112_i32 dim 1 : vector<32x128xf32>, i32 -> vector<32x128xf32>
    %c112_i32_24 = arith.constant 112 : i32
    %113 = tpu.dynamic_rotate %23 by %c112_i32_24 dim 1 : vector<32x128xf32>, i32 -> vector<32x128xf32>
    %114 = arith.mulf %21, %112 : vector<32x128xf32>
    %cst_25 = arith.constant dense<0.000000e+00> : vector<32x128xf32>
    %115 = tpu.matmul %114, %24, %cst_25 {dimension_numbers = #tpu.dot_dimension_numbers<[1], [0], [0], [1], [0, 0, 1, 1], [], []>} : vector<32x128xf32>, vector<128x128xf32>, vector<32x128xf32> -> vector<32x128xf32>
    %116 = arith.maximumf %102, %115 : vector<32x128xf32>
    %117 = arith.subf %102, %116 : vector<32x128xf32>
    %118 = math.exp %117 : vector<32x128xf32>
    %119 = arith.subf %115, %116 : vector<32x128xf32>
    %120 = math.exp %119 : vector<32x128xf32>
    %121 = arith.mulf %118, %108 : vector<32x128xf32>
    %122 = arith.addf %121, %120 : vector<32x128xf32>
    %123 = arith.mulf %118, %111 : vector<32x128xf32>
    %124 = arith.mulf %120, %113 : vector<32x128xf32>
    %125 = arith.addf %123, %124 : vector<32x128xf32>
    %126 = tpu.reciprocal %122 : vector<32x128xf32> -> vector<32x128xf32>
    %127 = arith.mulf %125, %126 : vector<32x128xf32>
    %c0_26 = arith.constant 0 : index
    %c0_27 = arith.constant 0 : index
    %128 = vector.load %arg5[%c0_26, %c0_27] : memref<128x128xf32, #tpu.memory_space<vmem>>, vector<128x128xf32>
    %cst_28 = arith.constant dense<0.000000e+00> : vector<32x128xf32>
    %129 = tpu.matmul %127, %128, %cst_28 {dimension_numbers = #tpu.dot_dimension_numbers<[1], [0], [0], [1], [0, 0, 1, 1], [], []>} : vector<32x128xf32>, vector<128x128xf32>, vector<32x128xf32> -> vector<32x128xf32>
    %c0_29 = arith.constant 0 : index
    %c0_30 = arith.constant 0 : index
    %130 = vector.load %arg6[%c0_29, %c0_30] : memref<1x128xf32, #tpu.memory_space<vmem>>, vector<1x128xf32>
    %131 = vector.broadcast %130 : vector<1x128xf32> to vector<32x128xf32>
    %132 = arith.addf %129, %131 : vector<32x128xf32>
    %c0_31 = arith.constant 0 : index
    %c0_32 = arith.constant 0 : index
    %133 = vector.load %arg7[%c0_31, %c0_32] : memref<32x128xf32, #tpu.memory_space<vmem>>, vector<32x128xf32>
    tpu.vector_store %arg7[%c0_31, %c0_32], %132 {strides = array<i32>} : memref<32x128xf32, #tpu.memory_space<vmem>>, vector<32x128xf32>,
    return
  }
  func.func @transform_0(%arg0: i32) -> (i32, i32) {
    %c0_i32 = arith.constant 0 : i32
    %c0_i32_0 = arith.constant 0 : i32
    return %arg0, %c0_i32 : i32, i32
  }
  func.func @transform_1(%arg0: i32) -> (i32, i32) {
    %c0_i32 = arith.constant 0 : i32
    %c0_i32_0 = arith.constant 0 : i32
    %c0_i32_1 = arith.constant 0 : i32
    return %c0_i32, %c0_i32_0 : i32, i32
  }
  func.func @transform_2(%arg0: i32) -> (i32, i32) {
    %c0_i32 = arith.constant 0 : i32
    %c0_i32_0 = arith.constant 0 : i32
    %c0_i32_1 = arith.constant 0 : i32
    return %c0_i32, %c0_i32_0 : i32, i32
  }
  func.func @transform_3(%arg0: i32) -> (i32, i32) {
    %c0_i32 = arith.constant 0 : i32
    %c0_i32_0 = arith.constant 0 : i32
    %c0_i32_1 = arith.constant 0 : i32
    return %c0_i32, %c0_i32_0 : i32, i32
  }
  func.func @transform_4(%arg0: i32) -> (i32, i32) {
    %c0_i32 = arith.constant 0 : i32
    %c0_i32_0 = arith.constant 0 : i32
    %c0_i32_1 = arith.constant 0 : i32
    return %c0_i32, %c0_i32_0 : i32, i32
  }
  func.func @transform_5(%arg0: i32) -> (i32, i32) {
    %c0_i32 = arith.constant 0 : i32
    %c0_i32_0 = arith.constant 0 : i32
    %c0_i32_1 = arith.constant 0 : i32
    return %c0_i32, %c0_i32_0 : i32, i32
  }
  func.func @transform_6(%arg0: i32) -> (i32, i32) {
    %c0_i32 = arith.constant 0 : i32
    %c0_i32_0 = arith.constant 0 : i32
    return %arg0, %c0_i32 : i32, i32
  }
}

</mosaic_0001>

<llo_original>
// kernel: tpu_custom_call.1
$region0: #{tpu_custom_call.1}
  #allocation0 [shape = 'u32[]', space=smem, size = 0x4, offset = 0x4, fixed_abs, tag = 'smem constant byte address 0x4 - core index']
  #allocation1 [shape = 'u32[144,128]{1,0:T(1,128)}', space=vmem, size = 0x12000, scoped, tag = 'internal scratch']
  %s0 = inlined_call_operand.vmem [shape: f32[64,8], index: 0, kind: input, shape index: {}]
  %s1 = inlined_call_operand.hbm [shape: f32[64,384], index: 1, kind: input, shape index: {}]
  %s2 = inlined_call_operand.vmem [shape: f32[1,384], index: 2, kind: input, shape index: {}]
  %s3 = inlined_call_operand.hbm [shape: f32[128,128], index: 3, kind: input, shape index: {}]
  %s4 = inlined_call_operand.hbm [shape: f32[128,128], index: 4, kind: input, shape index: {}]
  %s5 = inlined_call_operand.vmem [shape: f32[1,128], index: 5, kind: input, shape index: {}]
  %s6 = inlined_call_operand.hbm [shape: f32[64,128], index: 6, kind: output, shape index: {}]
  %s7 = sld [smem:[#allocation0]]
  $region69: #{tpu_custom_call.1} parent=0
    _
  %s9 = ssub.s32 1, %s7
  %s10 = scalar_select 0, %s9, %s7
  $region1: #{tpu_custom_call.1} parent=0
    #allocation2 [shape = 'u8[98304]{0}', space=vmem, size = 0x18000, scoped, tag = 'input window, operand 1, single buffered']
    #allocation3 [shape = 's32[2]{0}', space=sflag, size = 0x8, scoped, tag = 'scoped memory for tpu_custom_call.1']
    #allocation4 [shape = 's32[2]{0}', space=sflag, size = 0x8, scoped, tag = 'scoped memory for tpu_custom_call.1']
    #allocation5 [shape = 'u8[65536]{0}', space=vmem, size = 0x10000, scoped, tag = 'input window, operand 3, single buffered']
    #allocation6 [shape = 's32[1]{0}', space=sflag, size = 0x4, scoped, tag = 'scoped memory for tpu_custom_call.1']
    #allocation7 [shape = 'u8[65536]{0}', space=vmem, size = 0x10000, scoped, tag = 'input window, operand 4, single buffered']
    #allocation8 [shape = 'u8[32768]{0}', space=vmem, size = 0x8000, scoped, tag = 'output window, operand 0']
    %11 = vsyncpa [#allocation3], 0
    %12 = vsyncpa [#allocation6], 0
    %13 = vsyncpa [#allocation4], 0
    %s14 = scalar_lea.sflag [#allocation4], 1
    %15 = vsyncpa %s14, 0
    loop: start=0, step=1, limit=4
    $region2: #{tpu_custom_call.1} parent=1 // loop_pre_header
      _
    $region3: #{tpu_custom_call.1} parent=1 // loop_header
      %s17 = sphi 0, %s21
      %p18 = scmp.ge.s32.totalorder %s17, 4
      %s27 = sphi 0, %s29
      %s30 = sphi 0, %s27
      %s31 = sphi 0, %s30
      %s47 = sphi 0, %s31
      %s51 = sphi 0, %s51
      %s53 = sphi 0, %s51
      %s54 = sphi 0, %s53
      %s68 = sphi 0, %s54
      %s72 = sphi 0, %s72
      %s74 = sphi 0, %s72
      %s75 = sphi 0, %s74
      %s89 = sphi 0, %s75
      %s93 = sphi 0, %s93
      %s95 = sphi 0, %s93
      %s96 = sphi 0, %s95
      %s110 = sphi 0, %s96
      %s114 = sphi 0, %s114
      %s116 = sphi 0, %s114
      %s117 = sphi 0, %s116
      %s131 = sphi 0, %s117
      %s135 = sphi 0, %s135
      %s137 = sphi 0, %s135
      %s138 = sphi 0, %s137
      %s152 = sphi 0, %s138
      %s158 = sphi 0, %s160
      %s161 = sphi 0, %s158
      %s162 = sphi 0, %s161
      %s178 = sphi 0, %s162
    $region4: #{tpu_custom_call.1} parent=1 // loop_header_branch
      %20 = sbr.rel (%p18) target = $region8
    $region5: #{tpu_custom_call.1} parent=1 // loop_body
      %s22 = ssub.s32 %s17, 1
      %s23 = ssub.s32 %s17, 2
      %s24 = sadd.s32 %s17, 1
      %s25 = ssub.s32 %s17, %s24
      %p26 = scmp.eq.s32.totalorder %s25, 0
      %s28 = sadd.s32 %s27, 1
      %s29 = scalar_select %p26, %s27, %s28
      %p32 = pneg %p26
      %p33 = scmp.eq.s32.totalorder %s17, 1
      %p34 = por %p32, %p33
      %p35 = scmp.ne.s32.totalorder %s27, %s30
      %p36 = scmp.eq.s32.totalorder %s17, 0
      %p37 = por %p35, %p36
      %p38 = scmp.ne.s32.totalorder %s27, %s30
      %p39 = scmp.eq.s32.totalorder %s22, 1
      %p40 = por %p38, %p39
      %p41 = scmp.ne.s32.totalorder %s30, %s31
      %p42 = scmp.eq.s32.totalorder %s22, 0
      %p43 = por %p41, %p42
      %p44 = scmp.ne.s32.totalorder %s30, %s31
      %p45 = scmp.eq.s32.totalorder %s23, 1
      %p46 = por %p44, %p45
      %p48 = scmp.ne.s32.totalorder %s31, %s47
      %p49 = scmp.eq.s32.totalorder %s23, 0
      %p50 = por %p48, %p49
      %s52 = sadd.s32 %s51, 1
      %p55 = scmp.eq.s32.totalorder %s17, 1
      %p56 = scmp.ne.s32.totalorder %s51, %s53
      %p57 = scmp.eq.s32.totalorder %s17, 0
      %p58 = por %p56, %p57
      %p59 = scmp.ne.s32.totalorder %s51, %s53
      %p60 = scmp.eq.s32.totalorder %s22, 1
      %p61 = por %p59, %p60
      %p62 = scmp.ne.s32.totalorder %s53, %s54
      %p63 = scmp.eq.s32.totalorder %s22, 0
      %p64 = por %p62, %p63
      %p65 = scmp.ne.s32.totalorder %s53, %s54
      %p66 = scmp.eq.s32.totalorder %s23, 1
      %p67 = por %p65, %p66
      %p69 = scmp.ne.s32.totalorder %s54, %s68
      %p70 = scmp.eq.s32.totalorder %s23, 0
      %p71 = por %p69, %p70
      %s73 = sadd.s32 %s72, 1
      %p76 = scmp.eq.s32.totalorder %s17, 1
      %p77 = scmp.ne.s32.totalorder %s72, %s74
      %p78 = scmp.eq.s32.totalorder %s17, 0
      %p79 = por %p77, %p78
      %p80 = scmp.ne.s32.totalorder %s72, %s74
      %p81 = scmp.eq.s32.totalorder %s22, 1
      %p82 = por %p80, %p81
      %p83 = scmp.ne.s32.totalorder %s74, %s75
      %p84 = scmp.eq.s32.totalorder %s22, 0
      %p85 = por %p83, %p84
      %p86 = scmp.ne.s32.totalorder %s74, %s75
      %p87 = scmp.eq.s32.totalorder %s23, 1
      %p88 = por %p86, %p87
      %p90 = scmp.ne.s32.totalorder %s75, %s89
      %p91 = scmp.eq.s32.totalorder %s23, 0
      %p92 = por %p90, %p91
      %s94 = sadd.s32 %s93, 1
      %p97 = scmp.eq.s32.totalorder %s17, 1
      %p98 = scmp.ne.s32.totalorder %s93, %s95
      %p99 = scmp.eq.s32.totalorder %s17, 0
      %p100 = por %p98, %p99
      %p101 = scmp.ne.s32.totalorder %s93, %s95
      %p102 = scmp.eq.s32.totalorder %s22, 1
      %p103 = por %p101, %p102
      %p104 = scmp.ne.s32.totalorder %s95, %s96
      %p105 = scmp.eq.s32.totalorder %s22, 0
      %p106 = por %p104, %p105
      %p107 = scmp.ne.s32.totalorder %s95, %s96
      %p108 = scmp.eq.s32.totalorder %s23, 1
      %p109 = por %p107, %p108
      %p111 = scmp.ne.s32.totalorder %s96, %s110
      %p112 = scmp.eq.s32.totalorder %s23, 0
      %p113 = por %p111, %p112
      %s115 = sadd.s32 %s114, 1
      %p118 = scmp.eq.s32.totalorder %s17, 1
      %p119 = scmp.ne.s32.totalorder %s114, %s116
      %p120 = scmp.eq.s32.totalorder %s17, 0
      %p121 = por %p119, %p120
      %p122 = scmp.ne.s32.totalorder %s114, %s116
      %p123 = scmp.eq.s32.totalorder %s22, 1
      %p124 = por %p122, %p123
      %p125 = scmp.ne.s32.totalorder %s116, %s117
      %p126 = scmp.eq.s32.totalorder %s22, 0
      %p127 = por %p125, %p126
      %p128 = scmp.ne.s32.totalorder %s116, %s117
      %p129 = scmp.eq.s32.totalorder %s23, 1
      %p130 = por %p128, %p129
      %p132 = scmp.ne.s32.totalorder %s117, %s131
      %p133 = scmp.eq.s32.totalorder %s23, 0
      %p134 = por %p132, %p133
      %s136 = sadd.s32 %s135, 1
      %p139 = scmp.eq.s32.totalorder %s17, 1
      %p140 = scmp.ne.s32.totalorder %s135, %s137
      %p141 = scmp.eq.s32.totalorder %s17, 0
      %p142 = por %p140, %p141
      %p143 = scmp.ne.s32.totalorder %s135, %s137
      %p144 = scmp.eq.s32.totalorder %s22, 1
      %p145 = por %p143, %p144
      %p146 = scmp.ne.s32.totalorder %s137, %s138
      %p147 = scmp.eq.s32.totalorder %s22, 0
      %p148 = por %p146, %p147
      %p149 = scmp.ne.s32.totalorder %s137, %s138
      %p150 = scmp.eq.s32.totalorder %s23, 1
      %p151 = por %p149, %p150
      %p153 = scmp.ne.s32.totalorder %s138, %s152
      %p154 = scmp.eq.s32.totalorder %s23, 0
      %p155 = por %p153, %p154
      %s156 = ssub.s32 %s17, %s24
      %p157 = scmp.eq.s32.totalorder %s156, 0
      %s159 = sadd.s32 %s158, 1
      %s160 = scalar_select %p157, %s158, %s159
      %p163 = pneg %p157
      %p164 = scmp.eq.s32.totalorder %s17, 1
      %p165 = por %p163, %p164
      %p166 = scmp.ne.s32.totalorder %s158, %s161
      %p167 = scmp.eq.s32.totalorder %s17, 0
      %p168 = por %p166, %p167
      %p169 = scmp.ne.s32.totalorder %s158, %s161
      %p170 = scmp.eq.s32.totalorder %s22, 1
      %p171 = por %p169, %p170
      %p172 = scmp.ne.s32.totalorder %s161, %s162
      %p173 = scmp.eq.s32.totalorder %s22, 0
      %p174 = por %p172, %p173
      %p175 = scmp.ne.s32.totalorder %s161, %s162
      %p176 = scmp.eq.s32.totalorder %s23, 1
      %p177 = por %p175, %p176
      %p179 = scmp.ne.s32.totalorder %s162, %s178
      %p180 = scmp.eq.s32.totalorder %s23, 0
      %p181 = por %p179, %p180
      %p182 = scmp.le.s32.totalorder 1, %s17
      %p183 = scmp.lt.s32.totalorder %s17, 3
      %p184 = pnand %p182, %p183
      %p185 = pneg %p184
      // Predicated region
      $region9: #{tpu_custom_call.1} parent=5 // pred_check
        _
      $region10: #{tpu_custom_call.1} parent=5 // pred_check_branch
        %187 = sbr.rel (%p184) target = $region12
      $region11: #{tpu_custom_call.1} parent=5 // pred_region
        %s188 = ssub.s32 %s17, 1
        // Predicated region
        $region13: #{tpu_custom_call.1} parent=11 // pred_check
          %p189 = pneg %p64
        $region14: #{tpu_custom_call.1} parent=11 // pred_check_branch
          %191 = sbr.rel (%p189) target = $region16
        $region15: #{tpu_custom_call.1} parent=11 // pred_region
          %s193 = ssub.s32 3072, 3072
          %194 = vsyncadd [#allocation3], %s193
          %s195 = sshll.u32 [#allocation2], 4
          %s196 = int_to_ptr.vmem [resolvable:$true] %s195
          %201 = dma.hbm_to_vmem [thread:$0]  %s1, 3072, %s196, [#allocation3], 384, 384, 24
        $region16: #{tpu_custom_call.1} parent=11 // pred_fallthru
          _
        // Predicated region
        $region17: #{tpu_custom_call.1} parent=11 // pred_check
          %p202 = pneg %p85
        $region18: #{tpu_custom_call.1} parent=11 // pred_check_branch
          %204 = sbr.rel (%p202) target = $region20
        $region19: #{tpu_custom_call.1} parent=11 // pred_region
          _
        $region20: #{tpu_custom_call.1} parent=11 // pred_fallthru
          _
        // Predicated region
        $region21: #{tpu_custom_call.1} parent=11 // pred_check
          %p205 = pneg %p106
        $region22: #{tpu_custom_call.1} parent=11 // pred_check_branch
          %207 = sbr.rel (%p205) target = $region24
        $region23: #{tpu_custom_call.1} parent=11 // pred_region
          %s209 = ssub.s32 2048, 2048
          %210 = vsyncadd [#allocation6], %s209
          %s211 = sshll.u32 [#allocation5], 4
          %s212 = int_to_ptr.vmem [resolvable:$true] %s211
          %217 = dma.hbm_to_vmem [thread:$0]  %s3, 2048, %s212, [#allocation6], 128, 128, 8
        $region24: #{tpu_custom_call.1} parent=11 // pred_fallthru
          _
        // Predicated region
        $region25: #{tpu_custom_call.1} parent=11 // pred_check
          %p218 = pneg %p127
        $region26: #{tpu_custom_call.1} parent=11 // pred_check_branch
          %220 = sbr.rel (%p218) target = $region28
        $region27: #{tpu_custom_call.1} parent=11 // pred_region
          %s222 = ssub.s32 2048, 2048
          %223 = vsyncadd [#allocation6], %s222
          %s224 = sshll.u32 [#allocation7], 4
          %s225 = int_to_ptr.vmem [resolvable:$true] %s224
          %230 = dma.hbm_to_vmem [thread:$0]  %s4, 2048, %s225, [#allocation6], 128, 128, 8
        $region28: #{tpu_custom_call.1} parent=11 // pred_fallthru
          _
        // Predicated region
        $region29: #{tpu_custom_call.1} parent=11 // pred_check
          %p231 = pneg %p148
        $region30: #{tpu_custom_call.1} parent=11 // pred_check_branch
          %233 = sbr.rel (%p231) target = $region32
        $region31: #{tpu_custom_call.1} parent=11 // pred_region
          _
        $region32: #{tpu_custom_call.1} parent=11 // pred_fallthru
          _
      $region12: #{tpu_custom_call.1} parent=5 // pred_fallthru
        _
      %p234 = scmp.lt.s32.totalorder %s17, 2
      // Predicated region
      $region33: #{tpu_custom_call.1} parent=5 // pred_check
        %p235 = pneg %p234
      $region34: #{tpu_custom_call.1} parent=5 // pred_check_branch
        %237 = sbr.rel (%p235) target = $region36
      $region35: #{tpu_custom_call.1} parent=5 // pred_region
        // Predicated region
        $region37: #{tpu_custom_call.1} parent=35 // pred_check
          %p238 = pneg %p37
        $region38: #{tpu_custom_call.1} parent=35 // pred_check_branch
          %240 = sbr.rel (%p238) target = $region40
        $region39: #{tpu_custom_call.1} parent=35 // pred_region
          %s241 = smul.u32 4, %s17
          %p242 = scmp.lt.s32.totalorder %s241, 7
          %s243 = scalar_select %p242, %s241, 7
          %s244 = smul.addr %s243, 8
          %s245 = scalar_lea.vmem %s0, %s244
          %s246 = smul.u32 4, %s17
        $region40: #{tpu_custom_call.1} parent=35 // pred_fallthru
          _
      $region36: #{tpu_custom_call.1} parent=5 // pred_fallthru
        _
      %p247 = scmp.le.s32.totalorder 1, %s17
      %p248 = scmp.lt.s32.totalorder %s17, 3
      %p249 = pnand %p247, %p248
      %p250 = pneg %p249
      // Predicated region
      $region41: #{tpu_custom_call.1} parent=5 // pred_check
        _
      $region42: #{tpu_custom_call.1} parent=5 // pred_check_branch
        %252 = sbr.rel (%p249) target = $region44
      $region43: #{tpu_custom_call.1} parent=5 // pred_region
        %s253 = ssub.s32 %s17, 1
        // Predicated region
        $region45: #{tpu_custom_call.1} parent=43 // pred_check
          %p254 = pneg %p64
        $region46: #{tpu_custom_call.1} parent=43 // pred_check_branch
          %256 = sbr.rel (%p254) target = $region48
        $region47: #{tpu_custom_call.1} parent=43 // pred_region
          %257 = dma.done [#allocation3], 3072
        $region48: #{tpu_custom_call.1} parent=43 // pred_fallthru
          _
        // Predicated region
        $region49: #{tpu_custom_call.1} parent=43 // pred_check
          %p258 = pneg %p106
        $region50: #{tpu_custom_call.1} parent=43 // pred_check_branch
          %260 = sbr.rel (%p258) target = $region52
        $region51: #{tpu_custom_call.1} parent=43 // pred_region
          %261 = dma.done [#allocation6], 2048
        $region52: #{tpu_custom_call.1} parent=43 // pred_fallthru
          _
        // Predicated region
        $region53: #{tpu_custom_call.1} parent=43 // pred_check
          %p262 = pneg %p127
        $region54: #{tpu_custom_call.1} parent=43 // pred_check_branch
          %264 = sbr.rel (%p262) target = $region56
        $region55: #{tpu_custom_call.1} parent=43 // pred_region
          %265 = dma.done [#allocation6], 2048
        $region56: #{tpu_custom_call.1} parent=43 // pred_fallthru
          _
        %s266 = smul.u32 4, %s22
        %p267 = scmp.lt.s32.totalorder %s266, 7
        %s268 = scalar_select %p267, %s266, 7
        %s269 = smul.addr %s268, 8
        %s270 = scalar_lea.vmem %s0, %s269
        %p271 = pneg %p43
        %p272 = pneg %p40
        %p273 = pneg %p64
        %p274 = pneg %p61
        %p275 = pneg %p85
        %p276 = pneg %p82
        %p277 = pneg %p106
        %p278 = pneg %p103
        %p279 = pneg %p127
        %p280 = pneg %p124
        %p281 = pneg %p148
        %p282 = pneg %p145
        %p283 = pneg %p174
        %p284 = pneg %p171
        %s285 = sand.u32 %s161, 1
        %s286 = scalar_lea.sflag [#allocation4], %s285
        %s287 = sand.u32 %s161, 1
        %s288 = smul.addr %s287, 32
        %s289 = scalar_lea.vmem [#allocation8], %s288
        %s290 = smul.u32 4, %s22
        %p291 = scmp.lt.s32.totalorder %s290, 7
        %s292 = scalar_select %p291, %s290, 7
        %s293 = smul.addr %s292, 8
        %s294 = scalar_lea.vmem %s0, %s293
        %s295 = smul.u32 4, %s22
        %s296 = smul.u32 4, %s22
        %v297 = vld [vmem:[%s294] sm:$0xff]
        %v298 = vld [vmem:[%s294 + $0x8] sm:$0xff]
        %v299 = vld [vmem:[%s294 + $0x10] sm:$0xff]
        %v300 = vld [vmem:[%s294 + $0x18] sm:$0xff]
        %v301 = vtanh.pop %v297
        %v302 = vtanh.pop %v298
        %v303 = vtanh.pop %v299
        %v304 = vtanh.pop %v300
        %v305 = vmul.f32 %v301, %v301
        %v306 = vmul.f32 %v302, %v302
        %v307 = vmul.f32 %v303, %v303
        %v308 = vmul.f32 %v304, %v304
        %v309 = vmul.f32 %v305, %v301
        %v310 = vmul.f32 %v306, %v302
        %v311 = vmul.f32 %v307, %v303
        %v312 = vmul.f32 %v308, %v304
        %v313 = vmul.f32 %v301, -0.5
        %v314 = vmul.f32 %v302, -0.5
        %v315 = vmul.f32 %v303, -0.5
        %v316 = vmul.f32 %v304, -0.5
        %v317 = vmul.f32 %v313, %v301
        %v318 = vmul.f32 %v314, %v302
        %v319 = vmul.f32 %v315, %v303
        %v320 = vmul.f32 %v316, %v304
        %v321 = vmul.f32 %v317, 1.442695
        %v322 = vpow.pop %v321
        %v323 = vmul.f32 %v318, 1.442695
        %v324 = vpow.pop %v323
        %v325 = vmul.f32 %v319, 1.442695
        %v326 = vpow.pop %v325
        %v327 = vmul.f32 %v320, 1.442695
        %v328 = vpow.pop %v327
        %v329 = vmul.f32 %v322, 0.7511256
        %v330 = vmul.f32 %v324, 0.7511256
        %v331 = vmul.f32 %v326, 0.7511256
        %v332 = vmul.f32 %v328, 0.7511256
        %v333 = vmul.f32 %v301, %v329
        %v334 = vmul.f32 %v302, %v330
        %v335 = vmul.f32 %v303, %v331
        %v336 = vmul.f32 %v304, %v332
        %v337 = vmul.f32 %v305, %v329
        %v338 = vmul.f32 %v306, %v330
        %v339 = vmul.f32 %v307, %v331
        %v340 = vmul.f32 %v308, %v332
        %v341 = vmul.f32 %v309, %v329
        %v342 = vmul.f32 %v310, %v330
        %v343 = vmul.f32 %v311, %v331
        %v344 = vmul.f32 %v312, %v332
        %349 = vrot.lane.b32.xlu0 %v301, 8
        %v350 = vpop.permute.xlu0 %349
        %351 = vrot.lane.b32.xlu0 %v302, 8
        %v352 = vpop.permute.xlu0 %351
        %353 = vrot.lane.b32.xlu0 %v303, 8
        %v354 = vpop.permute.xlu0 %353
        %355 = vrot.lane.b32.xlu0 %v304, 8
        %v356 = vpop.permute.xlu0 %355
        %365 = vrot.lane.b32.xlu0 %v305, 16
        %v366 = vpop.permute.xlu0 %365
        %367 = vrot.lane.b32.xlu0 %v306, 16
        %v368 = vpop.permute.xlu0 %367
        %369 = vrot.lane.b32.xlu0 %v307, 16
        %v370 = vpop.permute.xlu0 %369
        %371 = vrot.lane.b32.xlu0 %v308, 16
        %v372 = vpop.permute.xlu0 %371
        %381 = vrot.lane.b32.xlu0 %v309, 24
        %v382 = vpop.permute.xlu0 %381
        %383 = vrot.lane.b32.xlu0 %v310, 24
        %v384 = vpop.permute.xlu0 %383
        %385 = vrot.lane.b32.xlu0 %v311, 24
        %v386 = vpop.permute.xlu0 %385
        %387 = vrot.lane.b32.xlu0 %v312, 24
        %v388 = vpop.permute.xlu0 %387
        %397 = vrot.lane.b32.xlu0 %v329, 32
        %v398 = vpop.permute.xlu0 %397
        %399 = vrot.lane.b32.xlu0 %v330, 32
        %v400 = vpop.permute.xlu0 %399
        %401 = vrot.lane.b32.xlu0 %v331, 32
        %v402 = vpop.permute.xlu0 %401
        %403 = vrot.lane.b32.xlu0 %v332, 32
        %v404 = vpop.permute.xlu0 %403
        %413 = vrot.lane.b32.xlu0 %v333, 40
        %v414 = vpop.permute.xlu0 %413
        %415 = vrot.lane.b32.xlu0 %v334, 40
        %v416 = vpop.permute.xlu0 %415
        %417 = vrot.lane.b32.xlu0 %v335, 40
        %v418 = vpop.permute.xlu0 %417
        %419 = vrot.lane.b32.xlu0 %v336, 40
        %v420 = vpop.permute.xlu0 %419
        %429 = vrot.lane.b32.xlu0 %v337, 48
        %v430 = vpop.permute.xlu0 %429
        %431 = vrot.lane.b32.xlu0 %v338, 48
        %v432 = vpop.permute.xlu0 %431
        %433 = vrot.lane.b32.xlu0 %v339, 48
        %v434 = vpop.permute.xlu0 %433
        %435 = vrot.lane.b32.xlu0 %v340, 48
        %v436 = vpop.permute.xlu0 %435
        %445 = vrot.lane.b32.xlu0 %v341, 56
        %v446 = vpop.permute.xlu0 %445
        %447 = vrot.lane.b32.xlu0 %v342, 56
        %v448 = vpop.permute.xlu0 %447
        %449 = vrot.lane.b32.xlu0 %v343, 56
        %v450 = vpop.permute.xlu0 %449
        %451 = vrot.lane.b32.xlu0 %v344, 56
        %v452 = vpop.permute.xlu0 %451
        %vm457 = vcmask 64512
        %v458 = vsel %vm457, 1.0, %v350
        %v459 = vsel %vm457, 1.0, %v352
        %v460 = vsel %vm457, 1.0, %v354
        %v461 = vsel %vm457, 1.0, %v356
        %vm462 = vcmask 130048
        %v463 = vsel %vm462, %v458, %v366
        %v464 = vsel %vm462, %v459, %v368
        %v465 = vsel %vm462, %v460, %v370
        %v466 = vsel %vm462, %v461, %v372
        %vm467 = vcmask 195584
        %v468 = vsel %vm467, %v463, %v382
        %v469 = vsel %vm467, %v464, %v384
        %v470 = vsel %vm467, %v465, %v386
        %v471 = vsel %vm467, %v466, %v388
        %vm472 = vcmask 261120
        %v473 = vsel %vm472, %v468, %v398
        %v474 = vsel %vm472, %v469, %v400
        %v475 = vsel %vm472, %v470, %v402
        %v476 = vsel %vm472, %v471, %v404
        %vm477 = vcmask 326656
        %v478 = vsel %vm477, %v473, %v414
        %v479 = vsel %vm477, %v474, %v416
        %v480 = vsel %vm477, %v475, %v418
        %v481 = vsel %vm477, %v476, %v420
        %vm482 = vcmask 392192
        %v483 = vsel %vm482, %v478, %v430
        %v484 = vsel %vm482, %v479, %v432
        %v485 = vsel %vm482, %v480, %v434
        %v486 = vsel %vm482, %v481, %v436
        %vm487 = vcmask 457728
        %v488 = vsel %vm487, %v483, %v446
        %v489 = vsel %vm487, %v484, %v448
        %v490 = vsel %vm487, %v485, %v450
        %v491 = vsel %vm487, %v486, %v452
        %v492 = vld [vmem:[#allocation2] sm:$0xff]
        %v493 = vld [vmem:[#allocation2 + $0x8] sm:$0xff]
        %v494 = vld [vmem:[#allocation2 + $0x10] sm:$0xff]
        %v495 = vld [vmem:[#allocation2 + $0x18] sm:$0xff]
        %v496 = vld [vmem:[#allocation2 + $0x20] sm:$0xff]
        %v497 = vld [vmem:[#allocation2 + $0x28] sm:$0xff]
        %v498 = vld [vmem:[#allocation2 + $0x30] sm:$0xff]
        %v499 = vld [vmem:[#allocation2 + $0x38] sm:$0xff]
        %v500 = vld [vmem:[#allocation2 + $0x40] sm:$0xff]
        %v501 = vld [vmem:[#allocation2 + $0x48] sm:$0xff]
        %v502 = vld [vmem:[#allocation2 + $0x50] sm:$0xff]
        %v503 = vld [vmem:[#allocation2 + $0x58] sm:$0xff]
        %v504 = vld [vmem:[#allocation2 + $0x60] sm:$0xff]
        %v505 = vld [vmem:[#allocation2 + $0x68] sm:$0xff]
        %v506 = vld [vmem:[#allocation2 + $0x70] sm:$0xff]
        %v507 = vld [vmem:[#allocation2 + $0x78] sm:$0xff]
        %v508 = vld [vmem:[#allocation2 + $0x80] sm:$0xff]
        %v509 = vld [vmem:[#allocation2 + $0x88] sm:$0xff]
        %v510 = vld [vmem:[#allocation2 + $0x90] sm:$0xff]
        %v511 = vld [vmem:[#allocation2 + $0x98] sm:$0xff]
        %v512 = vld [vmem:[#allocation2 + $0xa0] sm:$0xff]
        %v513 = vld [vmem:[#allocation2 + $0xa8] sm:$0xff]
        %v514 = vld [vmem:[#allocation2 + $0xb0] sm:$0xff]
        %v515 = vld [vmem:[#allocation2 + $0xb8] sm:$0xff]
        %v516 = vld [vmem:[%s2] sm:$0x7]
        %v518 = vlaneseq
        %v519 = vshrl.u32 %v518, 7
        %v520 = vsub.s32 0, %v519
        %v521 = vrot.slane %v516, %v520
        %v522 = vlaneseq
        %v523 = vshrl.u32 %v522, 7
        %v524 = vsub.s32 1, %v523
        %v525 = vrot.slane %v516, %v524
        %v526 = vlaneseq
        %v527 = vshrl.u32 %v526, 7
        %v528 = vsub.s32 2, %v527
        %v529 = vrot.slane %v516, %v528
        %vm533 = vcmask 523264
        %v535 = vsel %vm533, %v488, 0
        %v538 = vsel %vm533, %v489, 0
        %v541 = vsel %vm533, %v490, 0
        %v544 = vsel %vm533, %v491, 0
        %546 = vmatprep.subr.mxu0 0.0
        %547 = vmatpush1.msra.mxu0 0.0
        %548 = vmatprep.subr.mxu0 0.0
        %549 = vmatpush1.msra.mxu0 0.0
        %550 = vmatprep.subr.mxu0 0.0
        %551 = vmatpush1.msra.mxu0 0.0
        %552 = vmatprep.subr.mxu0 0.0
        %553 = vmatpush1.msra.mxu0 0.0
        %554 = vmatprep.subr.mxu0 0.0
        %555 = vmatpush1.msra.mxu0 0.0
        %556 = vmatprep.subr.mxu0 0.0
        %557 = vmatpush1.msra.mxu0 0.0
        %558 = vmatprep.subr.mxu0 0.0
        %559 = vmatpush1.msra.mxu0 0.0
        %560 = vmatprep.subr.mxu0 0.0
        %561 = vmatpush1.msra.mxu0 0.0
        %562 = vmatprep.subr.mxu0 %v514
        %563 = vmatpush1.msra.mxu0 %v513
        %564 = vmatprep.subr.mxu0 %v511
        %565 = vmatpush1.msra.mxu0 %v510
        %566 = vmatprep.subr.mxu0 %v508
        %567 = vmatpush1.msra.mxu0 %v507
        %568 = vmatprep.subr.mxu0 %v505
        %569 = vmatpush1.msra.mxu0 %v504
        %570 = vmatprep.subr.mxu0 %v502
        %571 = vmatpush1.msra.mxu0 %v501
        %572 = vmatprep.subr.mxu0 %v499
        %573 = vmatpush1.msra.mxu0 %v498
        %574 = vmatprep.subr.mxu0 %v496
        %575 = vmatpush1.msra.mxu0 %v495
        %576 = vmatprep.subr.mxu0 %v493
        %577 = vmatpush1.msra.mxu0 %v492
        %578 = vmatprep.subr.mxu0 0.0
        %579 = vmatpush2.msra.mxu0 0.0
        %580 = vmatprep.subr.mxu0 0.0
        %581 = vmatpush2.msra.mxu0 0.0
        %582 = vmatprep.subr.mxu0 0.0
        %583 = vmatpush2.msra.mxu0 0.0
        %584 = vmatprep.subr.mxu0 0.0
        %585 = vmatpush2.msra.mxu0 0.0
        %586 = vmatprep.subr.mxu0 0.0
        %587 = vmatpush2.msra.mxu0 0.0
        %588 = vmatprep.subr.mxu0 0.0
        %589 = vmatpush2.msra.mxu0 0.0
        %590 = vmatprep.subr.mxu0 0.0
        %591 = vmatpush2.msra.mxu0 0.0
        %592 = vmatprep.subr.mxu0 0.0
        %593 = vmatpush2.msra.mxu0 0.0
        %594 = vmatprep.subr.mxu0 0.0
        %595 = vmatpush2.msra.mxu0 0.0
        %596 = vmatprep.subr.mxu0 0.0
        %597 = vmatpush2.msra.mxu0 0.0
        %598 = vmatprep.subr.mxu0 0.0
        %599 = vmatpush2.msra.mxu0 0.0
        %600 = vmatprep.subr.mxu0 0.0
        %601 = vmatpush2.msra.mxu0 0.0
        %602 = vmatprep.subr.mxu0 0.0
        %603 = vmatpush2.msra.mxu0 0.0
        %604 = vmatprep.subr.mxu0 0.0
        %605 = vmatpush2.msra.mxu0 0.0
        %606 = vmatprep.subr.mxu0 0.0
        %607 = vmatpush2.msra.mxu0 0.0
        %608 = vmatprep.subr.mxu0 0.0
        %609 = vmatpush2.msra.mxu0 0.0
        %610 = vmatprep.mubr.f32.mxu0 0.0
        %611 = vmatmul.mubr.f32.gmra.mxu0 %v535
        %v612 = vpop.f32.mrf.mxu0
        %v613 = vadd.f32 %v521, %v612
        %v614 = vpop.f32.mrf.mxu0
        %v615 = vadd.f32 %v525, %v614
        %616 = vmatprep.mubr.f32.mxu0 0.0
        %617 = vmatmul.mubr.f32.gmra.mxu0 %v538
        %v618 = vpop.f32.mrf.mxu0
        %v619 = vadd.f32 %v521, %v618
        %v620 = vpop.f32.mrf.mxu0
        %v621 = vadd.f32 %v525, %v620
        %622 = vmatprep.mubr.f32.mxu0 0.0
        %623 = vmatmul.mubr.f32.gmra.mxu0 %v541
        %v624 = vpop.f32.mrf.mxu0
        %v625 = vadd.f32 %v521, %v624
        %v626 = vpop.f32.mrf.mxu0
        %v627 = vadd.f32 %v525, %v626
        %628 = vmatprep.mubr.f32.mxu0 0.0
        %629 = vmatmul.mubr.f32.gmra.mxu0 %v544
        %v630 = vpop.f32.mrf.mxu0
        %v631 = vadd.f32 %v521, %v630
        %v632 = vpop.f32.mrf.mxu0
        %v633 = vadd.f32 %v525, %v632
        %634 = vdwg.mxu0
        %635 = vmatprep.subr.mxu0 0.0
        %636 = vmatpush1.msra.mxu0 0.0
        %637 = vmatprep.subr.mxu0 0.0
        %638 = vmatpush1.msra.mxu0 0.0
        %639 = vmatprep.subr.mxu0 0.0
        %640 = vmatpush1.msra.mxu0 0.0
        %641 = vmatprep.subr.mxu0 0.0
        %642 = vmatpush1.msra.mxu0 0.0
        %643 = vmatprep.subr.mxu0 0.0
        %644 = vmatpush1.msra.mxu0 0.0
        %645 = vmatprep.subr.mxu0 0.0
        %646 = vmatpush1.msra.mxu0 0.0
        %647 = vmatprep.subr.mxu0 0.0
        %648 = vmatpush1.msra.mxu0 0.0
        %649 = vmatprep.subr.mxu0 0.0
        %650 = vmatpush1.msra.mxu0 0.0
        %651 = vmatprep.subr.mxu0 0.0
        %652 = vmatpush1.msra.mxu0 %v515
        %653 = vmatprep.subr.mxu0 0.0
        %654 = vmatpush1.msra.mxu0 %v512
        %655 = vmatprep.subr.mxu0 0.0
        %656 = vmatpush1.msra.mxu0 %v509
        %657 = vmatprep.subr.mxu0 0.0
        %658 = vmatpush1.msra.mxu0 %v506
        %659 = vmatprep.subr.mxu0 0.0
        %660 = vmatpush1.msra.mxu0 %v503
        %661 = vmatprep.subr.mxu0 0.0
        %662 = vmatpush1.msra.mxu0 %v500
        %663 = vmatprep.subr.mxu0 0.0
        %664 = vmatpush1.msra.mxu0 %v497
        %665 = vmatprep.subr.mxu0 0.0
        %666 = vmatpush1.msra.mxu0 %v494
        %667 = vmatprep.subr.mxu0 0.0
        %668 = vmatpush2.msra.mxu0 0.0
        %669 = vmatprep.subr.mxu0 0.0
        %670 = vmatpush2.msra.mxu0 0.0
        %671 = vmatprep.subr.mxu0 0.0
        %672 = vmatpush2.msra.mxu0 0.0
        %673 = vmatprep.subr.mxu0 0.0
        %674 = vmatpush2.msra.mxu0 0.0
        %675 = vmatprep.subr.mxu0 0.0
        %676 = vmatpush2.msra.mxu0 0.0
        %677 = vmatprep.subr.mxu0 0.0
        %678 = vmatpush2.msra.mxu0 0.0
        %679 = vmatprep.subr.mxu0 0.0
        %680 = vmatpush2.msra.mxu0 0.0
        %681 = vmatprep.subr.mxu0 0.0
        %682 = vmatpush2.msra.mxu0 0.0
        %683 = vmatprep.subr.mxu0 0.0
        %684 = vmatpush2.msra.mxu0 0.0
        %685 = vmatprep.subr.mxu0 0.0
        %686 = vmatpush2.msra.mxu0 0.0
        %687 = vmatprep.subr.mxu0 0.0
        %688 = vmatpush2.msra.mxu0 0.0
        %689 = vmatprep.subr.mxu0 0.0
        %690 = vmatpush2.msra.mxu0 0.0
        %691 = vmatprep.subr.mxu0 0.0
        %692 = vmatpush2.msra.mxu0 0.0
        %693 = vmatprep.subr.mxu0 0.0
        %694 = vmatpush2.msra.mxu0 0.0
        %695 = vmatprep.subr.mxu0 0.0
        %696 = vmatpush2.msra.mxu0 0.0
        %697 = vmatprep.subr.mxu0 0.0
        %698 = vmatpush2.msra.mxu0 0.0
        %699 = vmatprep.mubr.f32.mxu0 0.0
        %700 = vmatmul.mubr.f32.gmra.mxu0 %v535
        %v701 = vpop.f32.mrf.mxu0
        %v702 = vadd.f32 %v529, %v701
        %v703 = vpop.f32.mrf.mxu0
        %704 = vmatprep.mubr.f32.mxu0 0.0
        %705 = vmatmul.mubr.f32.gmra.mxu0 %v538
        %v706 = vpop.f32.mrf.mxu0
        %v707 = vadd.f32 %v529, %v706
        %v708 = vpop.f32.mrf.mxu0
        %709 = vmatprep.mubr.f32.mxu0 0.0
        %710 = vmatmul.mubr.f32.gmra.mxu0 %v541
        %v711 = vpop.f32.mrf.mxu0
        %v712 = vadd.f32 %v529, %v711
        %v713 = vpop.f32.mrf.mxu0
        %714 = vmatprep.mubr.f32.mxu0 0.0
        %715 = vmatmul.mubr.f32.gmra.mxu0 %v544
        %v716 = vpop.f32.mrf.mxu0
        %v717 = vadd.f32 %v529, %v716
        %v718 = vpop.f32.mrf.mxu0
        %719 = vdwg.mxu0
        %v720 = vld [vmem:[#allocation5] sm:$0xff]
        %v721 = vld [vmem:[#allocation5 + $0x8] sm:$0xff]
        %v722 = vld [vmem:[#allocation5 + $0x10] sm:$0xff]
        %v723 = vld [vmem:[#allocation5 + $0x18] sm:$0xff]
        %v724 = vld [vmem:[#allocation5 + $0x20] sm:$0xff]
        %v725 = vld [vmem:[#allocation5 + $0x28] sm:$0xff]
        %v726 = vld [vmem:[#allocation5 + $0x30] sm:$0xff]
        %v727 = vld [vmem:[#allocation5 + $0x38] sm:$0xff]
        %v728 = vld [vmem:[#allocation5 + $0x40] sm:$0xff]
        %v729 = vld [vmem:[#allocation5 + $0x48] sm:$0xff]
        %v730 = vld [vmem:[#allocation5 + $0x50] sm:$0xff]
        %v731 = vld [vmem:[#allocation5 + $0x58] sm:$0xff]
        %v732 = vld [vmem:[#allocation5 + $0x60] sm:$0xff]
        %v733 = vld [vmem:[#allocation5 + $0x68] sm:$0xff]
        %v734 = vld [vmem:[#allocation5 + $0x70] sm:$0xff]
        %v735 = vld [vmem:[#allocation5 + $0x78] sm:$0xff]
        %v736 = vmul.f32 %v613, %v615
        %v737 = vmul.f32 %v619, %v621
        %v738 = vmul.f32 %v625, %v627
        %v739 = vmul.f32 %v631, %v633
        %740 = vmatprep.subr.mxu0 0.0
        %741 = vmatpush1.msra.mxu0 %v735
        %742 = vmatprep.subr.mxu0 0.0
        %743 = vmatpush1.msra.mxu0 %v734
        %744 = vmatprep.subr.mxu0 0.0
        %745 = vmatpush1.msra.mxu0 %v733
        %746 = vmatprep.subr.mxu0 0.0
        %747 = vmatpush1.msra.mxu0 %v732
        %748 = vmatprep.subr.mxu0 0.0
        %749 = vmatpush1.msra.mxu0 %v731
        %750 = vmatprep.subr.mxu0 0.0
        %751 = vmatpush1.msra.mxu0 %v730
        %752 = vmatprep.subr.mxu0 0.0
        %753 = vmatpush1.msra.mxu0 %v729
        %754 = vmatprep.subr.mxu0 0.0
        %755 = vmatpush1.msra.mxu0 %v728
        %756 = vmatprep.subr.mxu0 0.0
        %757 = vmatpush1.msra.mxu0 %v727
        %758 = vmatprep.subr.mxu0 0.0
        %759 = vmatpush1.msra.mxu0 %v726
        %760 = vmatprep.subr.mxu0 0.0
        %761 = vmatpush1.msra.mxu0 %v725
        %762 = vmatprep.subr.mxu0 0.0
        %763 = vmatpush1.msra.mxu0 %v724
        %764 = vmatprep.subr.mxu0 0.0
        %765 = vmatpush1.msra.mxu0 %v723
        %766 = vmatprep.subr.mxu0 0.0
        %767 = vmatpush1.msra.mxu0 %v722
        %768 = vmatprep.subr.mxu0 0.0
        %769 = vmatpush1.msra.mxu0 %v721
        %770 = vmatprep.subr.mxu0 0.0
        %771 = vmatpush1.msra.mxu0 %v720
        %772 = vmatprep.subr.mxu0 0.0
        %773 = vmatpush2.msra.mxu0 0.0
        %774 = vmatprep.subr.mxu0 0.0
        %775 = vmatpush2.msra.mxu0 0.0
        %776 = vmatprep.subr.mxu0 0.0
        %777 = vmatpush2.msra.mxu0 0.0
        %778 = vmatprep.subr.mxu0 0.0
        %779 = vmatpush2.msra.mxu0 0.0
        %780 = vmatprep.subr.mxu0 0.0
        %781 = vmatpush2.msra.mxu0 0.0
        %782 = vmatprep.subr.mxu0 0.0
        %783 = vmatpush2.msra.mxu0 0.0
        %784 = vmatprep.subr.mxu0 0.0
        %785 = vmatpush2.msra.mxu0 0.0
        %786 = vmatprep.subr.mxu0 0.0
        %787 = vmatpush2.msra.mxu0 0.0
        %788 = vmatprep.subr.mxu0 0.0
        %789 = vmatpush2.msra.mxu0 0.0
        %790 = vmatprep.subr.mxu0 0.0
        %791 = vmatpush2.msra.mxu0 0.0
        %792 = vmatprep.subr.mxu0 0.0
        %793 = vmatpush2.msra.mxu0 0.0
        %794 = vmatprep.subr.mxu0 0.0
        %795 = vmatpush2.msra.mxu0 0.0
        %796 = vmatprep.subr.mxu0 0.0
        %797 = vmatpush2.msra.mxu0 0.0
        %798 = vmatprep.subr.mxu0 0.0
        %799 = vmatpush2.msra.mxu0 0.0
        %800 = vmatprep.subr.mxu0 0.0
        %801 = vmatpush2.msra.mxu0 0.0
        %802 = vmatprep.subr.mxu0 0.0
        %803 = vmatpush2.msra.mxu0 0.0
        %804 = vmatprep.mubr.f32.mxu0 0.0
        %805 = vmatmul.mubr.f32.gmra.mxu0 %v736
        %v806 = vpop.f32.mrf.mxu0
        %v807 = vadd.f32 0.0, %v806
        %v808 = vpop.f32.mrf.mxu0
        %809 = vmatprep.mubr.f32.mxu0 0.0
        %810 = vmatmul.mubr.f32.gmra.mxu0 %v737
        %v811 = vpop.f32.mrf.mxu0
        %v812 = vadd.f32 0.0, %v811
        %v813 = vpop.f32.mrf.mxu0
        %814 = vmatprep.mubr.f32.mxu0 0.0
        %815 = vmatmul.mubr.f32.gmra.mxu0 %v738
        %v816 = vpop.f32.mrf.mxu0
        %v817 = vadd.f32 0.0, %v816
        %v818 = vpop.f32.mrf.mxu0
        %819 = vmatprep.mubr.f32.mxu0 0.0
        %820 = vmatmul.mubr.f32.gmra.mxu0 %v739
        %v821 = vpop.f32.mrf.mxu0
        %v822 = vadd.f32 0.0, %v821
        %v823 = vpop.f32.mrf.mxu0
        %824 = vdwg.mxu0
        %825 = vrot.lane.b32.xlu0 %v615, 16
        %v826 = vpop.permute.xlu0 %825
        %827 = vrot.lane.b32.xlu0 %v621, 16
        %v828 = vpop.permute.xlu0 %827
        %829 = vrot.lane.b32.xlu0 %v627, 16
        %v830 = vpop.permute.xlu0 %829
        %831 = vrot.lane.b32.xlu0 %v633, 16
        %v832 = vpop.permute.xlu0 %831
        %833 = vrot.lane.b32.xlu0 %v702, 16
        %v834 = vpop.permute.xlu0 %833
        %835 = vrot.lane.b32.xlu0 %v707, 16
        %v836 = vpop.permute.xlu0 %835
        %837 = vrot.lane.b32.xlu0 %v712, 16
        %v838 = vpop.permute.xlu0 %837
        %839 = vrot.lane.b32.xlu0 %v717, 16
        %v840 = vpop.permute.xlu0 %839
        %v841 = vmul.f32 %v613, %v826
        %v842 = vmul.f32 %v619, %v828
        %v843 = vmul.f32 %v625, %v830
        %v844 = vmul.f32 %v631, %v832
        %845 = vmatprep.subr.mxu0 0.0
        %846 = vmatpush1.msra.mxu0 %v735
        %847 = vmatprep.subr.mxu0 0.0
        %848 = vmatpush1.msra.mxu0 %v734
        %849 = vmatprep.subr.mxu0 0.0
        %850 = vmatpush1.msra.mxu0 %v733
        %851 = vmatprep.subr.mxu0 0.0
        %852 = vmatpush1.msra.mxu0 %v732
        %853 = vmatprep.subr.mxu0 0.0
        %854 = vmatpush1.msra.mxu0 %v731
        %855 = vmatprep.subr.mxu0 0.0
        %856 = vmatpush1.msra.mxu0 %v730
        %857 = vmatprep.subr.mxu0 0.0
        %858 = vmatpush1.msra.mxu0 %v729
        %859 = vmatprep.subr.mxu0 0.0
        %860 = vmatpush1.msra.mxu0 %v728
        %861 = vmatprep.subr.mxu0 0.0
        %862 = vmatpush1.msra.mxu0 %v727
        %863 = vmatprep.subr.mxu0 0.0
        %864 = vmatpush1.msra.mxu0 %v726
        %865 = vmatprep.subr.mxu0 0.0
        %866 = vmatpush1.msra.mxu0 %v725
        %867 = vmatprep.subr.mxu0 0.0
        %868 = vmatpush1.msra.mxu0 %v724
        %869 = vmatprep.subr.mxu0 0.0
        %870 = vmatpush1.msra.mxu0 %v723
        %871 = vmatprep.subr.mxu0 0.0
        %872 = vmatpush1.msra.mxu0 %v722
        %873 = vmatprep.subr.mxu0 0.0
        %874 = vmatpush1.msra.mxu0 %v721
        %875 = vmatprep.subr.mxu0 0.0
        %876 = vmatpush1.msra.mxu0 %v720
        %877 = vmatprep.subr.mxu0 0.0
        %878 = vmatpush2.msra.mxu0 0.0
        %879 = vmatprep.subr.mxu0 0.0
        %880 = vmatpush2.msra.mxu0 0.0
        %881 = vmatprep.subr.mxu0 0.0
        %882 = vmatpush2.msra.mxu0 0.0
        %883 = vmatprep.subr.mxu0 0.0
        %884 = vmatpush2.msra.mxu0 0.0
        %885 = vmatprep.subr.mxu0 0.0
        %886 = vmatpush2.msra.mxu0 0.0
        %887 = vmatprep.subr.mxu0 0.0
        %888 = vmatpush2.msra.mxu0 0.0
        %889 = vmatprep.subr.mxu0 0.0
        %890 = vmatpush2.msra.mxu0 0.0
        %891 = vmatprep.subr.mxu0 0.0
        %892 = vmatpush2.msra.mxu0 0.0
        %893 = vmatprep.subr.mxu0 0.0
        %894 = vmatpush2.msra.mxu0 0.0
        %895 = vmatprep.subr.mxu0 0.0
        %896 = vmatpush2.msra.mxu0 0.0
        %897 = vmatprep.subr.mxu0 0.0
        %898 = vmatpush2.msra.mxu0 0.0
        %899 = vmatprep.subr.mxu0 0.0
        %900 = vmatpush2.msra.mxu0 0.0
        %901 = vmatprep.subr.mxu0 0.0
        %902 = vmatpush2.msra.mxu0 0.0
        %903 = vmatprep.subr.mxu0 0.0
        %904 = vmatpush2.msra.mxu0 0.0
        %905 = vmatprep.subr.mxu0 0.0
        %906 = vmatpush2.msra.mxu0 0.0
        %907 = vmatprep.subr.mxu0 0.0
        %908 = vmatpush2.msra.mxu0 0.0
        %909 = vmatprep.mubr.f32.mxu0 0.0
        %910 = vmatmul.mubr.f32.gmra.mxu0 %v841
        %v911 = vpop.f32.mrf.mxu0
        %v912 = vadd.f32 0.0, %v911
        %v913 = vpop.f32.mrf.mxu0
        %914 = vmatprep.mubr.f32.mxu0 0.0
        %915 = vmatmul.mubr.f32.gmra.mxu0 %v842
        %v916 = vpop.f32.mrf.mxu0
        %v917 = vadd.f32 0.0, %v916
        %v918 = vpop.f32.mrf.mxu0
        %919 = vmatprep.mubr.f32.mxu0 0.0
        %920 = vmatmul.mubr.f32.gmra.mxu0 %v843
        %v921 = vpop.f32.mrf.mxu0
        %v922 = vadd.f32 0.0, %v921
        %v923 = vpop.f32.mrf.mxu0
        %924 = vmatprep.mubr.f32.mxu0 0.0
        %925 = vmatmul.mubr.f32.gmra.mxu0 %v844
        %v926 = vpop.f32.mrf.mxu0
        %v927 = vadd.f32 0.0, %v926
        %v928 = vpop.f32.mrf.mxu0
        %929 = vdwg.mxu0
        %v930 = vmax.f32 %v807, %v912
        %v931 = vmax.f32 %v812, %v917
        %v932 = vmax.f32 %v817, %v922
        %v933 = vmax.f32 %v822, %v927
        %v934 = vsub.f32 %v807, %v930
        %v935 = vsub.f32 %v812, %v931
        %v936 = vsub.f32 %v817, %v932
        %v937 = vsub.f32 %v822, %v933
        %v938 = vmul.f32 %v934, 1.442695
        %v939 = vpow.pop %v938
        %v940 = vmul.f32 %v935, 1.442695
        %v941 = vpow.pop %v940
        %v942 = vmul.f32 %v936, 1.442695
        %v943 = vpow.pop %v942
        %v944 = vmul.f32 %v937, 1.442695
        %v945 = vpow.pop %v944
        %v946 = vsub.f32 %v912, %v930
        %v947 = vsub.f32 %v917, %v931
        %v948 = vsub.f32 %v922, %v932
        %v949 = vsub.f32 %v927, %v933
        %v950 = vmul.f32 %v946, 1.442695
        %v951 = vpow.pop %v950
        %v952 = vmul.f32 %v947, 1.442695
        %v953 = vpow.pop %v952
        %v954 = vmul.f32 %v948, 1.442695
        %v955 = vpow.pop %v954
        %v956 = vmul.f32 %v949, 1.442695
        %v957 = vpow.pop %v956
        %v958 = vadd.f32 %v939, %v951
        %v959 = vadd.f32 %v941, %v953
        %v960 = vadd.f32 %v943, %v955
        %v961 = vadd.f32 %v945, %v957
        %v962 = vmul.f32 %v939, %v702
        %v963 = vmul.f32 %v941, %v707
        %v964 = vmul.f32 %v943, %v712
        %v965 = vmul.f32 %v945, %v717
        %v966 = vmul.f32 %v951, %v834
        %v967 = vmul.f32 %v953, %v836
        %v968 = vmul.f32 %v955, %v838
        %v969 = vmul.f32 %v957, %v840
        %v970 = vadd.f32 %v962, %v966
        %v971 = vadd.f32 %v963, %v967
        %v972 = vadd.f32 %v964, %v968
        %v973 = vadd.f32 %v965, %v969
        %974 = vrot.lane.b32.xlu0 %v615, 32
        %v975 = vpop.permute.xlu0 %974
        %976 = vrot.lane.b32.xlu0 %v621, 32
        %v977 = vpop.permute.xlu0 %976
        %978 = vrot.lane.b32.xlu0 %v627, 32
        %v979 = vpop.permute.xlu0 %978
        %980 = vrot.lane.b32.xlu0 %v633, 32
        %v981 = vpop.permute.xlu0 %980
        %982 = vrot.lane.b32.xlu0 %v702, 32
        %v983 = vpop.permute.xlu0 %982
        %984 = vrot.lane.b32.xlu0 %v707, 32
        %v985 = vpop.permute.xlu0 %984
        %986 = vrot.lane.b32.xlu0 %v712, 32
        %v987 = vpop.permute.xlu0 %986
        %988 = vrot.lane.b32.xlu0 %v717, 32
        %v989 = vpop.permute.xlu0 %988
        %v990 = vmul.f32 %v613, %v975
        %v991 = vmul.f32 %v619, %v977
        %v992 = vmul.f32 %v625, %v979
        %v993 = vmul.f32 %v631, %v981
        %994 = vmatprep.subr.mxu0 0.0
        %995 = vmatpush1.msra.mxu0 %v735
        %996 = vmatprep.subr.mxu0 0.0
        %997 = vmatpush1.msra.mxu0 %v734
        %998 = vmatprep.subr.mxu0 0.0
        %999 = vmatpush1.msra.mxu0 %v733
        %1000 = vmatprep.subr.mxu0 0.0
        %1001 = vmatpush1.msra.mxu0 %v732
        %1002 = vmatprep.subr.mxu0 0.0
        %1003 = vmatpush1.msra.mxu0 %v731
        %1004 = vmatprep.subr.mxu0 0.0
        %1005 = vmatpush1.msra.mxu0 %v730
        %1006 = vmatprep.subr.mxu0 0.0
        %1007 = vmatpush1.msra.mxu0 %v729
        %1008 = vmatprep.subr.mxu0 0.0
        %1009 = vmatpush1.msra.mxu0 %v728
        %1010 = vmatprep.subr.mxu0 0.0
        %1011 = vmatpush1.msra.mxu0 %v727
        %1012 = vmatprep.subr.mxu0 0.0
        %1013 = vmatpush1.msra.mxu0 %v726
        %1014 = vmatprep.subr.mxu0 0.0
        %1015 = vmatpush1.msra.mxu0 %v725
        %1016 = vmatprep.subr.mxu0 0.0
        %1017 = vmatpush1.msra.mxu0 %v724
        %1018 = vmatprep.subr.mxu0 0.0
        %1019 = vmatpush1.msra.mxu0 %v723
        %1020 = vmatprep.subr.mxu0 0.0
        %1021 = vmatpush1.msra.mxu0 %v722
        %1022 = vmatprep.subr.mxu0 0.0
        %1023 = vmatpush1.msra.mxu0 %v721
        %1024 = vmatprep.subr.mxu0 0.0
        %1025 = vmatpush1.msra.mxu0 %v720
        %1026 = vmatprep.subr.mxu0 0.0
        %1027 = vmatpush2.msra.mxu0 0.0
        %1028 = vmatprep.subr.mxu0 0.0
        %1029 = vmatpush2.msra.mxu0 0.0
        %1030 = vmatprep.subr.mxu0 0.0
        %1031 = vmatpush2.msra.mxu0 0.0
        %1032 = vmatprep.subr.mxu0 0.0
        %1033 = vmatpush2.msra.mxu0 0.0
        %1034 = vmatprep.subr.mxu0 0.0
        %1035 = vmatpush2.msra.mxu0 0.0
        %1036 = vmatprep.subr.mxu0 0.0
        %1037 = vmatpush2.msra.mxu0 0.0
        %1038 = vmatprep.subr.mxu0 0.0
        %1039 = vmatpush2.msra.mxu0 0.0
        %1040 = vmatprep.subr.mxu0 0.0
        %1041 = vmatpush2.msra.mxu0 0.0
        %1042 = vmatprep.subr.mxu0 0.0
        %1043 = vmatpush2.msra.mxu0 0.0
        %1044 = vmatprep.subr.mxu0 0.0
        %1045 = vmatpush2.msra.mxu0 0.0
        %1046 = vmatprep.subr.mxu0 0.0
        %1047 = vmatpush2.msra.mxu0 0.0
        %1048 = vmatprep.subr.mxu0 0.0
        %1049 = vmatpush2.msra.mxu0 0.0
        %1050 = vmatprep.subr.mxu0 0.0
        %1051 = vmatpush2.msra.mxu0 0.0
        %1052 = vmatprep.subr.mxu0 0.0
        %1053 = vmatpush2.msra.mxu0 0.0
        %1054 = vmatprep.subr.mxu0 0.0
        %1055 = vmatpush2.msra.mxu0 0.0
        %1056 = vmatprep.subr.mxu0 0.0
        %1057 = vmatpush2.msra.mxu0 0.0
        %1058 = vmatprep.mubr.f32.mxu0 0.0
        %1059 = vmatmul.mubr.f32.gmra.mxu0 %v990
        %v1060 = vpop.f32.mrf.mxu0
        %v1061 = vadd.f32 0.0, %v1060
        %v1062 = vpop.f32.mrf.mxu0
        %1063 = vmatprep.mubr.f32.mxu0 0.0
        %1064 = vmatmul.mubr.f32.gmra.mxu0 %v991
        %v1065 = vpop.f32.mrf.mxu0
        %v1066 = vadd.f32 0.0, %v1065
        %v1067 = vpop.f32.mrf.mxu0
        %1068 = vmatprep.mubr.f32.mxu0 0.0
        %1069 = vmatmul.mubr.f32.gmra.mxu0 %v992
        %v1070 = vpop.f32.mrf.mxu0
        %v1071 = vadd.f32 0.0, %v1070
        %v1072 = vpop.f32.mrf.mxu0
        %1073 = vmatprep.mubr.f32.mxu0 0.0
        %1074 = vmatmul.mubr.f32.gmra.mxu0 %v993
        %v1075 = vpop.f32.mrf.mxu0
        %v1076 = vadd.f32 0.0, %v1075
        %v1077 = vpop.f32.mrf.mxu0
        %1078 = vdwg.mxu0
        %v1079 = vmax.f32 %v930, %v1061
        %v1080 = vmax.f32 %v931, %v1066
        %v1081 = vmax.f32 %v932, %v1071
        %v1082 = vmax.f32 %v933, %v1076
        %v1083 = vsub.f32 %v930, %v1079
        %v1084 = vsub.f32 %v931, %v1080
        %v1085 = vsub.f32 %v932, %v1081
        %v1086 = vsub.f32 %v933, %v1082
        %v1087 = vmul.f32 %v1083, 1.442695
        %v1088 = vpow.pop %v1087
        %v1089 = vmul.f32 %v1084, 1.442695
        %v1090 = vpow.pop %v1089
        %v1091 = vmul.f32 %v1085, 1.442695
        %v1092 = vpow.pop %v1091
        %v1093 = vmul.f32 %v1086, 1.442695
        %v1094 = vpow.pop %v1093
        %v1095 = vsub.f32 %v1061, %v1079
        %v1096 = vsub.f32 %v1066, %v1080
        %v1097 = vsub.f32 %v1071, %v1081
        %v1098 = vsub.f32 %v1076, %v1082
        %v1099 = vmul.f32 %v1095, 1.442695
        %v1100 = vpow.pop %v1099
        %v1101 = vmul.f32 %v1096, 1.442695
        %v1102 = vpow.pop %v1101
        %v1103 = vmul.f32 %v1097, 1.442695
        %v1104 = vpow.pop %v1103
        %v1105 = vmul.f32 %v1098, 1.442695
        %v1106 = vpow.pop %v1105
        %v1107 = vmul.f32 %v1088, %v958
        %v1108 = vmul.f32 %v1090, %v959
        %v1109 = vmul.f32 %v1092, %v960
        %v1110 = vmul.f32 %v1094, %v961
        %v1111 = vadd.f32 %v1107, %v1100
        %v1112 = vadd.f32 %v1108, %v1102
        %v1113 = vadd.f32 %v1109, %v1104
        %v1114 = vadd.f32 %v1110, %v1106
        %v1115 = vmul.f32 %v1088, %v970
        %v1116 = vmul.f32 %v1090, %v971
        %v1117 = vmul.f32 %v1092, %v972
        %v1118 = vmul.f32 %v1094, %v973
        %v1119 = vmul.f32 %v1100, %v983
        %v1120 = vmul.f32 %v1102, %v985
        %v1121 = vmul.f32 %v1104, %v987
        %v1122 = vmul.f32 %v1106, %v989
        %v1123 = vadd.f32 %v1115, %v1119
        %v1124 = vadd.f32 %v1116, %v1120
        %v1125 = vadd.f32 %v1117, %v1121
        %v1126 = vadd.f32 %v1118, %v1122
        %1127 = vrot.lane.b32.xlu0 %v615, 48
        %v1128 = vpop.permute.xlu0 %1127
        %1129 = vrot.lane.b32.xlu0 %v621, 48
        %v1130 = vpop.permute.xlu0 %1129
        %1131 = vrot.lane.b32.xlu0 %v627, 48
        %v1132 = vpop.permute.xlu0 %1131
        %1133 = vrot.lane.b32.xlu0 %v633, 48
        %v1134 = vpop.permute.xlu0 %1133
        %1135 = vrot.lane.b32.xlu0 %v702, 48
        %v1136 = vpop.permute.xlu0 %1135
        %1137 = vrot.lane.b32.xlu0 %v707, 48
        %v1138 = vpop.permute.xlu0 %1137
        %1139 = vrot.lane.b32.xlu0 %v712, 48
        %v1140 = vpop.permute.xlu0 %1139
        %1141 = vrot.lane.b32.xlu0 %v717, 48
        %v1142 = vpop.permute.xlu0 %1141
        %v1143 = vmul.f32 %v613, %v1128
        %v1144 = vmul.f32 %v619, %v1130
        %v1145 = vmul.f32 %v625, %v1132
        %v1146 = vmul.f32 %v631, %v1134
        %1147 = vmatprep.subr.mxu0 0.0
        %1148 = vmatpush1.msra.mxu0 %v735
        %1149 = vmatprep.subr.mxu0 0.0
        %1150 = vmatpush1.msra.mxu0 %v734
        %1151 = vmatprep.subr.mxu0 0.0
        %1152 = vmatpush1.msra.mxu0 %v733
        %1153 = vmatprep.subr.mxu0 0.0
        %1154 = vmatpush1.msra.mxu0 %v732
        %1155 = vmatprep.subr.mxu0 0.0
        %1156 = vmatpush1.msra.mxu0 %v731
        %1157 = vmatprep.subr.mxu0 0.0
        %1158 = vmatpush1.msra.mxu0 %v730
        %1159 = vmatprep.subr.mxu0 0.0
        %1160 = vmatpush1.msra.mxu0 %v729
        %1161 = vmatprep.subr.mxu0 0.0
        %1162 = vmatpush1.msra.mxu0 %v728
        %1163 = vmatprep.subr.mxu0 0.0
        %1164 = vmatpush1.msra.mxu0 %v727
        %1165 = vmatprep.subr.mxu0 0.0
        %1166 = vmatpush1.msra.mxu0 %v726
        %1167 = vmatprep.subr.mxu0 0.0
        %1168 = vmatpush1.msra.mxu0 %v725
        %1169 = vmatprep.subr.mxu0 0.0
        %1170 = vmatpush1.msra.mxu0 %v724
        %1171 = vmatprep.subr.mxu0 0.0
        %1172 = vmatpush1.msra.mxu0 %v723
        %1173 = vmatprep.subr.mxu0 0.0
        %1174 = vmatpush1.msra.mxu0 %v722
        %1175 = vmatprep.subr.mxu0 0.0
        %1176 = vmatpush1.msra.mxu0 %v721
        %1177 = vmatprep.subr.mxu0 0.0
        %1178 = vmatpush1.msra.mxu0 %v720
        %1179 = vmatprep.subr.mxu0 0.0
        %1180 = vmatpush2.msra.mxu0 0.0
        %1181 = vmatprep.subr.mxu0 0.0
        %1182 = vmatpush2.msra.mxu0 0.0
        %1183 = vmatprep.subr.mxu0 0.0
        %1184 = vmatpush2.msra.mxu0 0.0
        %1185 = vmatprep.subr.mxu0 0.0
        %1186 = vmatpush2.msra.mxu0 0.0
        %1187 = vmatprep.subr.mxu0 0.0
        %1188 = vmatpush2.msra.mxu0 0.0
        %1189 = vmatprep.subr.mxu0 0.0
        %1190 = vmatpush2.msra.mxu0 0.0
        %1191 = vmatprep.subr.mxu0 0.0
        %1192 = vmatpush2.msra.mxu0 0.0
        %1193 = vmatprep.subr.mxu0 0.0
        %1194 = vmatpush2.msra.mxu0 0.0
        %1195 = vmatprep.subr.mxu0 0.0
        %1196 = vmatpush2.msra.mxu0 0.0
        %1197 = vmatprep.subr.mxu0 0.0
        %1198 = vmatpush2.msra.mxu0 0.0
        %1199 = vmatprep.subr.mxu0 0.0
        %1200 = vmatpush2.msra.mxu0 0.0
        %1201 = vmatprep.subr.mxu0 0.0
        %1202 = vmatpush2.msra.mxu0 0.0
        %1203 = vmatprep.subr.mxu0 0.0
        %1204 = vmatpush2.msra.mxu0 0.0
        %1205 = vmatprep.subr.mxu0 0.0
        %1206 = vmatpush2.msra.mxu0 0.0
        %1207 = vmatprep.subr.mxu0 0.0
        %1208 = vmatpush2.msra.mxu0 0.0
        %1209 = vmatprep.subr.mxu0 0.0
        %1210 = vmatpush2.msra.mxu0 0.0
        %1211 = vmatprep.mubr.f32.mxu0 0.0
        %1212 = vmatmul.mubr.f32.gmra.mxu0 %v1143
        %v1213 = vpop.f32.mrf.mxu0
        %v1214 = vadd.f32 0.0, %v1213
        %v1215 = vpop.f32.mrf.mxu0
        %1216 = vmatprep.mubr.f32.mxu0 0.0
        %1217 = vmatmul.mubr.f32.gmra.mxu0 %v1144
        %v1218 = vpop.f32.mrf.mxu0
        %v1219 = vadd.f32 0.0, %v1218
        %v1220 = vpop.f32.mrf.mxu0
        %1221 = vmatprep.mubr.f32.mxu0 0.0
        %1222 = vmatmul.mubr.f32.gmra.mxu0 %v1145
        %v1223 = vpop.f32.mrf.mxu0
        %v1224 = vadd.f32 0.0, %v1223
        %v1225 = vpop.f32.mrf.mxu0
        %1226 = vmatprep.mubr.f32.mxu0 0.0
        %1227 = vmatmul.mubr.f32.gmra.mxu0 %v1146
        %v1228 = vpop.f32.mrf.mxu0
        %v1229 = vadd.f32 0.0, %v1228
        %v1230 = vpop.f32.mrf.mxu0
        %1231 = vdwg.mxu0
        %v1232 = vmax.f32 %v1079, %v1214
        %v1233 = vmax.f32 %v1080, %v1219
        %v1234 = vmax.f32 %v1081, %v1224
        %v1235 = vmax.f32 %v1082, %v1229
        %v1236 = vsub.f32 %v1079, %v1232
        %v1237 = vsub.f32 %v1080, %v1233
        %v1238 = vsub.f32 %v1081, %v1234
        %v1239 = vsub.f32 %v1082, %v1235
        %v1240 = vmul.f32 %v1236, 1.442695
        %v1241 = vpow.pop %v1240
        %v1242 = vmul.f32 %v1237, 1.442695
        %v1243 = vpow.pop %v1242
        %v1244 = vmul.f32 %v1238, 1.442695
        %v1245 = vpow.pop %v1244
        %v1246 = vmul.f32 %v1239, 1.442695
        %v1247 = vpow.pop %v1246
        %v1248 = vsub.f32 %v1214, %v1232
        %v1249 = vsub.f32 %v1219, %v1233
        %v1250 = vsub.f32 %v1224, %v1234
        %v1251 = vsub.f32 %v1229, %v1235
        %v1252 = vmul.f32 %v1248, 1.442695
        %v1253 = vpow.pop %v1252
        %v1254 = vmul.f32 %v1249, 1.442695
        %v1255 = vpow.pop %v1254
        %v1256 = vmul.f32 %v1250, 1.442695
        %v1257 = vpow.pop %v1256
        %v1258 = vmul.f32 %v1251, 1.442695
        %v1259 = vpow.pop %v1258
        %v1260 = vmul.f32 %v1241, %v1111
        %v1261 = vmul.f32 %v1243, %v1112
        %v1262 = vmul.f32 %v1245, %v1113
        %v1263 = vmul.f32 %v1247, %v1114
        %v1264 = vadd.f32 %v1260, %v1253
        %v1265 = vadd.f32 %v1261, %v1255
        %v1266 = vadd.f32 %v1262, %v1257
        %v1267 = vadd.f32 %v1263, %v1259
        %v1268 = vmul.f32 %v1241, %v1123
        %v1269 = vmul.f32 %v1243, %v1124
        %v1270 = vmul.f32 %v1245, %v1125
        %v1271 = vmul.f32 %v1247, %v1126
        %v1272 = vmul.f32 %v1253, %v1136
        %v1273 = vmul.f32 %v1255, %v1138
        %v1274 = vmul.f32 %v1257, %v1140
        %v1275 = vmul.f32 %v1259, %v1142
        %v1276 = vadd.f32 %v1268, %v1272
        %v1277 = vadd.f32 %v1269, %v1273
        %v1278 = vadd.f32 %v1270, %v1274
        %v1279 = vadd.f32 %v1271, %v1275
        %1280 = vrot.lane.b32.xlu0 %v615, 64
        %v1281 = vpop.permute.xlu0 %1280
        %1282 = vrot.lane.b32.xlu0 %v621, 64
        %v1283 = vpop.permute.xlu0 %1282
        %1284 = vrot.lane.b32.xlu0 %v627, 64
        %v1285 = vpop.permute.xlu0 %1284
        %1286 = vrot.lane.b32.xlu0 %v633, 64
        %v1287 = vpop.permute.xlu0 %1286
        %1288 = vrot.lane.b32.xlu0 %v702, 64
        %v1289 = vpop.permute.xlu0 %1288
        %1290 = vrot.lane.b32.xlu0 %v707, 64
        %v1291 = vpop.permute.xlu0 %1290
        %1292 = vrot.lane.b32.xlu0 %v712, 64
        %v1293 = vpop.permute.xlu0 %1292
        %1294 = vrot.lane.b32.xlu0 %v717, 64
        %v1295 = vpop.permute.xlu0 %1294
        %v1296 = vmul.f32 %v613, %v1281
        %v1297 = vmul.f32 %v619, %v1283
        %v1298 = vmul.f32 %v625, %v1285
        %v1299 = vmul.f32 %v631, %v1287
        %1300 = vmatprep.subr.mxu0 0.0
        %1301 = vmatpush1.msra.mxu0 %v735
        %1302 = vmatprep.subr.mxu0 0.0
        %1303 = vmatpush1.msra.mxu0 %v734
        %1304 = vmatprep.subr.mxu0 0.0
        %1305 = vmatpush1.msra.mxu0 %v733
        %1306 = vmatprep.subr.mxu0 0.0
        %1307 = vmatpush1.msra.mxu0 %v732
        %1308 = vmatprep.subr.mxu0 0.0
        %1309 = vmatpush1.msra.mxu0 %v731
        %1310 = vmatprep.subr.mxu0 0.0
        %1311 = vmatpush1.msra.mxu0 %v730
        %1312 = vmatprep.subr.mxu0 0.0
        %1313 = vmatpush1.msra.mxu0 %v729
        %1314 = vmatprep.subr.mxu0 0.0
        %1315 = vmatpush1.msra.mxu0 %v728
        %1316 = vmatprep.subr.mxu0 0.0
        %1317 = vmatpush1.msra.mxu0 %v727
        %1318 = vmatprep.subr.mxu0 0.0
        %1319 = vmatpush1.msra.mxu0 %v726
        %1320 = vmatprep.subr.mxu0 0.0
        %1321 = vmatpush1.msra.mxu0 %v725
        %1322 = vmatprep.subr.mxu0 0.0
        %1323 = vmatpush1.msra.mxu0 %v724
        %1324 = vmatprep.subr.mxu0 0.0
        %1325 = vmatpush1.msra.mxu0 %v723
        %1326 = vmatprep.subr.mxu0 0.0
        %1327 = vmatpush1.msra.mxu0 %v722
        %1328 = vmatprep.subr.mxu0 0.0
        %1329 = vmatpush1.msra.mxu0 %v721
        %1330 = vmatprep.subr.mxu0 0.0
        %1331 = vmatpush1.msra.mxu0 %v720
        %1332 = vmatprep.subr.mxu0 0.0
        %1333 = vmatpush2.msra.mxu0 0.0
        %1334 = vmatprep.subr.mxu0 0.0
        %1335 = vmatpush2.msra.mxu0 0.0
        %1336 = vmatprep.subr.mxu0 0.0
        %1337 = vmatpush2.msra.mxu0 0.0
        %1338 = vmatprep.subr.mxu0 0.0
        %1339 = vmatpush2.msra.mxu0 0.0
        %1340 = vmatprep.subr.mxu0 0.0
        %1341 = vmatpush2.msra.mxu0 0.0
        %1342 = vmatprep.subr.mxu0 0.0
        %1343 = vmatpush2.msra.mxu0 0.0
        %1344 = vmatprep.subr.mxu0 0.0
        %1345 = vmatpush2.msra.mxu0 0.0
        %1346 = vmatprep.subr.mxu0 0.0
        %1347 = vmatpush2.msra.mxu0 0.0
        %1348 = vmatprep.subr.mxu0 0.0
        %1349 = vmatpush2.msra.mxu0 0.0
        %1350 = vmatprep.subr.mxu0 0.0
        %1351 = vmatpush2.msra.mxu0 0.0
        %1352 = vmatprep.subr.mxu0 0.0
        %1353 = vmatpush2.msra.mxu0 0.0
        %1354 = vmatprep.subr.mxu0 0.0
        %1355 = vmatpush2.msra.mxu0 0.0
        %1356 = vmatprep.subr.mxu0 0.0
        %1357 = vmatpush2.msra.mxu0 0.0
        %1358 = vmatprep.subr.mxu0 0.0
        %1359 = vmatpush2.msra.mxu0 0.0
        %1360 = vmatprep.subr.mxu0 0.0
        %1361 = vmatpush2.msra.mxu0 0.0
        %1362 = vmatprep.subr.mxu0 0.0
        %1363 = vmatpush2.msra.mxu0 0.0
        %1364 = vmatprep.mubr.f32.mxu0 0.0
        %1365 = vmatmul.mubr.f32.gmra.mxu0 %v1296
        %v1366 = vpop.f32.mrf.mxu0
        %v1367 = vadd.f32 0.0, %v1366
        %v1368 = vpop.f32.mrf.mxu0
        %1369 = vmatprep.mubr.f32.mxu0 0.0
        %1370 = vmatmul.mubr.f32.gmra.mxu0 %v1297
        %v1371 = vpop.f32.mrf.mxu0
        %v1372 = vadd.f32 0.0, %v1371
        %v1373 = vpop.f32.mrf.mxu0
        %1374 = vmatprep.mubr.f32.mxu0 0.0
        %1375 = vmatmul.mubr.f32.gmra.mxu0 %v1298
        %v1376 = vpop.f32.mrf.mxu0
        %v1377 = vadd.f32 0.0, %v1376
        %v1378 = vpop.f32.mrf.mxu0
        %1379 = vmatprep.mubr.f32.mxu0 0.0
        %1380 = vmatmul.mubr.f32.gmra.mxu0 %v1299
        %v1381 = vpop.f32.mrf.mxu0
        %v1382 = vadd.f32 0.0, %v1381
        %v1383 = vpop.f32.mrf.mxu0
        %1384 = vdwg.mxu0
        %v1385 = vmax.f32 %v1232, %v1367
        %v1386 = vmax.f32 %v1233, %v1372
        %v1387 = vmax.f32 %v1234, %v1377
        %v1388 = vmax.f32 %v1235, %v1382
        %v1389 = vsub.f32 %v1232, %v1385
        %v1390 = vsub.f32 %v1233, %v1386
        %v1391 = vsub.f32 %v1234, %v1387
        %v1392 = vsub.f32 %v1235, %v1388
        %v1393 = vmul.f32 %v1389, 1.442695
        %v1394 = vpow.pop %v1393
        %v1395 = vmul.f32 %v1390, 1.442695
        %v1396 = vpow.pop %v1395
        %v1397 = vmul.f32 %v1391, 1.442695
        %v1398 = vpow.pop %v1397
        %v1399 = vmul.f32 %v1392, 1.442695
        %v1400 = vpow.pop %v1399
        %v1401 = vsub.f32 %v1367, %v1385
        %v1402 = vsub.f32 %v1372, %v1386
        %v1403 = vsub.f32 %v1377, %v1387
        %v1404 = vsub.f32 %v1382, %v1388
        %v1405 = vmul.f32 %v1401, 1.442695
        %v1406 = vpow.pop %v1405
        %v1407 = vmul.f32 %v1402, 1.442695
        %v1408 = vpow.pop %v1407
        %v1409 = vmul.f32 %v1403, 1.442695
        %v1410 = vpow.pop %v1409
        %v1411 = vmul.f32 %v1404, 1.442695
        %v1412 = vpow.pop %v1411
        %v1413 = vmul.f32 %v1394, %v1264
        %v1414 = vmul.f32 %v1396, %v1265
        %v1415 = vmul.f32 %v1398, %v1266
        %v1416 = vmul.f32 %v1400, %v1267
        %v1417 = vadd.f32 %v1413, %v1406
        %v1418 = vadd.f32 %v1414, %v1408
        %v1419 = vadd.f32 %v1415, %v1410
        %v1420 = vadd.f32 %v1416, %v1412
        %v1421 = vmul.f32 %v1394, %v1276
        %v1422 = vmul.f32 %v1396, %v1277
        %v1423 = vmul.f32 %v1398, %v1278
        %v1424 = vmul.f32 %v1400, %v1279
        %v1425 = vmul.f32 %v1406, %v1289
        %v1426 = vmul.f32 %v1408, %v1291
        %v1427 = vmul.f32 %v1410, %v1293
        %v1428 = vmul.f32 %v1412, %v1295
        %v1429 = vadd.f32 %v1421, %v1425
        %v1430 = vadd.f32 %v1422, %v1426
        %v1431 = vadd.f32 %v1423, %v1427
        %v1432 = vadd.f32 %v1424, %v1428
        %1433 = vrot.lane.b32.xlu0 %v615, 80
        %v1434 = vpop.permute.xlu0 %1433
        %1435 = vrot.lane.b32.xlu0 %v621, 80
        %v1436 = vpop.permute.xlu0 %1435
        %1437 = vrot.lane.b32.xlu0 %v627, 80
        %v1438 = vpop.permute.xlu0 %1437
        %1439 = vrot.lane.b32.xlu0 %v633, 80
        %v1440 = vpop.permute.xlu0 %1439
        %1441 = vrot.lane.b32.xlu0 %v702, 80
        %v1442 = vpop.permute.xlu0 %1441
        %1443 = vrot.lane.b32.xlu0 %v707, 80
        %v1444 = vpop.permute.xlu0 %1443
        %1445 = vrot.lane.b32.xlu0 %v712, 80
        %v1446 = vpop.permute.xlu0 %1445
        %1447 = vrot.lane.b32.xlu0 %v717, 80
        %v1448 = vpop.permute.xlu0 %1447
        %v1449 = vmul.f32 %v613, %v1434
        %v1450 = vmul.f32 %v619, %v1436
        %v1451 = vmul.f32 %v625, %v1438
        %v1452 = vmul.f32 %v631, %v1440
        %1453 = vmatprep.subr.mxu0 0.0
        %1454 = vmatpush1.msra.mxu0 %v735
        %1455 = vmatprep.subr.mxu0 0.0
        %1456 = vmatpush1.msra.mxu0 %v734
        %1457 = vmatprep.subr.mxu0 0.0
        %1458 = vmatpush1.msra.mxu0 %v733
        %1459 = vmatprep.subr.mxu0 0.0
        %1460 = vmatpush1.msra.mxu0 %v732
        %1461 = vmatprep.subr.mxu0 0.0
        %1462 = vmatpush1.msra.mxu0 %v731
        %1463 = vmatprep.subr.mxu0 0.0
        %1464 = vmatpush1.msra.mxu0 %v730
        %1465 = vmatprep.subr.mxu0 0.0
        %1466 = vmatpush1.msra.mxu0 %v729
        %1467 = vmatprep.subr.mxu0 0.0
        %1468 = vmatpush1.msra.mxu0 %v728
        %1469 = vmatprep.subr.mxu0 0.0
        %1470 = vmatpush1.msra.mxu0 %v727
        %1471 = vmatprep.subr.mxu0 0.0
        %1472 = vmatpush1.msra.mxu0 %v726
        %1473 = vmatprep.subr.mxu0 0.0
        %1474 = vmatpush1.msra.mxu0 %v725
        %1475 = vmatprep.subr.mxu0 0.0
        %1476 = vmatpush1.msra.mxu0 %v724
        %1477 = vmatprep.subr.mxu0 0.0
        %1478 = vmatpush1.msra.mxu0 %v723
        %1479 = vmatprep.subr.mxu0 0.0
        %1480 = vmatpush1.msra.mxu0 %v722
        %1481 = vmatprep.subr.mxu0 0.0
        %1482 = vmatpush1.msra.mxu0 %v721
        %1483 = vmatprep.subr.mxu0 0.0
        %1484 = vmatpush1.msra.mxu0 %v720
        %1485 = vmatprep.subr.mxu0 0.0
        %1486 = vmatpush2.msra.mxu0 0.0
        %1487 = vmatprep.subr.mxu0 0.0
        %1488 = vmatpush2.msra.mxu0 0.0
        %1489 = vmatprep.subr.mxu0 0.0
        %1490 = vmatpush2.msra.mxu0 0.0
        %1491 = vmatprep.subr.mxu0 0.0
        %1492 = vmatpush2.msra.mxu0 0.0
        %1493 = vmatprep.subr.mxu0 0.0
        %1494 = vmatpush2.msra.mxu0 0.0
        %1495 = vmatprep.subr.mxu0 0.0
        %1496 = vmatpush2.msra.mxu0 0.0
        %1497 = vmatprep.subr.mxu0 0.0
        %1498 = vmatpush2.msra.mxu0 0.0
        %1499 = vmatprep.subr.mxu0 0.0
        %1500 = vmatpush2.msra.mxu0 0.0
        %1501 = vmatprep.subr.mxu0 0.0
        %1502 = vmatpush2.msra.mxu0 0.0
        %1503 = vmatprep.subr.mxu0 0.0
        %1504 = vmatpush2.msra.mxu0 0.0
        %1505 = vmatprep.subr.mxu0 0.0
        %1506 = vmatpush2.msra.mxu0 0.0
        %1507 = vmatprep.subr.mxu0 0.0
        %1508 = vmatpush2.msra.mxu0 0.0
        %1509 = vmatprep.subr.mxu0 0.0
        %1510 = vmatpush2.msra.mxu0 0.0
        %1511 = vmatprep.subr.mxu0 0.0
        %1512 = vmatpush2.msra.mxu0 0.0
        %1513 = vmatprep.subr.mxu0 0.0
        %1514 = vmatpush2.msra.mxu0 0.0
        %1515 = vmatprep.subr.mxu0 0.0
        %1516 = vmatpush2.msra.mxu0 0.0
        %1517 = vmatprep.mubr.f32.mxu0 0.0
        %1518 = vmatmul.mubr.f32.gmra.mxu0 %v1449
        %v1519 = vpop.f32.mrf.mxu0
        %v1520 = vadd.f32 0.0, %v1519
        %v1521 = vpop.f32.mrf.mxu0
        %1522 = vmatprep.mubr.f32.mxu0 0.0
        %1523 = vmatmul.mubr.f32.gmra.mxu0 %v1450
        %v1524 = vpop.f32.mrf.mxu0
        %v1525 = vadd.f32 0.0, %v1524
        %v1526 = vpop.f32.mrf.mxu0
        %1527 = vmatprep.mubr.f32.mxu0 0.0
        %1528 = vmatmul.mubr.f32.gmra.mxu0 %v1451
        %v1529 = vpop.f32.mrf.mxu0
        %v1530 = vadd.f32 0.0, %v1529
        %v1531 = vpop.f32.mrf.mxu0
        %1532 = vmatprep.mubr.f32.mxu0 0.0
        %1533 = vmatmul.mubr.f32.gmra.mxu0 %v1452
        %v1534 = vpop.f32.mrf.mxu0
        %v1535 = vadd.f32 0.0, %v1534
        %v1536 = vpop.f32.mrf.mxu0
        %1537 = vdwg.mxu0
        %v1538 = vmax.f32 %v1385, %v1520
        %v1539 = vmax.f32 %v1386, %v1525
        %v1540 = vmax.f32 %v1387, %v1530
        %v1541 = vmax.f32 %v1388, %v1535
        %v1542 = vsub.f32 %v1385, %v1538
        %v1543 = vsub.f32 %v1386, %v1539
        %v1544 = vsub.f32 %v1387, %v1540
        %v1545 = vsub.f32 %v1388, %v1541
        %v1546 = vmul.f32 %v1542, 1.442695
        %v1547 = vpow.pop %v1546
        %v1548 = vmul.f32 %v1543, 1.442695
        %v1549 = vpow.pop %v1548
        %v1550 = vmul.f32 %v1544, 1.442695
        %v1551 = vpow.pop %v1550
        %v1552 = vmul.f32 %v1545, 1.442695
        %v1553 = vpow.pop %v1552
        %v1554 = vsub.f32 %v1520, %v1538
        %v1555 = vsub.f32 %v1525, %v1539
        %v1556 = vsub.f32 %v1530, %v1540
        %v1557 = vsub.f32 %v1535, %v1541
        %v1558 = vmul.f32 %v1554, 1.442695
        %v1559 = vpow.pop %v1558
        %v1560 = vmul.f32 %v1555, 1.442695
        %v1561 = vpow.pop %v1560
        %v1562 = vmul.f32 %v1556, 1.442695
        %v1563 = vpow.pop %v1562
        %v1564 = vmul.f32 %v1557, 1.442695
        %v1565 = vpow.pop %v1564
        %v1566 = vmul.f32 %v1547, %v1417
        %v1567 = vmul.f32 %v1549, %v1418
        %v1568 = vmul.f32 %v1551, %v1419
        %v1569 = vmul.f32 %v1553, %v1420
        %v1570 = vadd.f32 %v1566, %v1559
        %v1571 = vadd.f32 %v1567, %v1561
        %v1572 = vadd.f32 %v1568, %v1563
        %v1573 = vadd.f32 %v1569, %v1565
        %v1574 = vmul.f32 %v1547, %v1429
        %v1575 = vmul.f32 %v1549, %v1430
        %v1576 = vmul.f32 %v1551, %v1431
        %v1577 = vmul.f32 %v1553, %v1432
        %v1578 = vmul.f32 %v1559, %v1442
        %v1579 = vmul.f32 %v1561, %v1444
        %v1580 = vmul.f32 %v1563, %v1446
        %v1581 = vmul.f32 %v1565, %v1448
        %v1582 = vadd.f32 %v1574, %v1578
        %v1583 = vadd.f32 %v1575, %v1579
        %v1584 = vadd.f32 %v1576, %v1580
        %v1585 = vadd.f32 %v1577, %v1581
        %1586 = vrot.lane.b32.xlu0 %v615, 96
        %v1587 = vpop.permute.xlu0 %1586
        %1588 = vrot.lane.b32.xlu0 %v621, 96
        %v1589 = vpop.permute.xlu0 %1588
        %1590 = vrot.lane.b32.xlu0 %v627, 96
        %v1591 = vpop.permute.xlu0 %1590
        %1592 = vrot.lane.b32.xlu0 %v633, 96
        %v1593 = vpop.permute.xlu0 %1592
        %1594 = vrot.lane.b32.xlu0 %v702, 96
        %v1595 = vpop.permute.xlu0 %1594
        %1596 = vrot.lane.b32.xlu0 %v707, 96
        %v1597 = vpop.permute.xlu0 %1596
        %1598 = vrot.lane.b32.xlu0 %v712, 96
        %v1599 = vpop.permute.xlu0 %1598
        %1600 = vrot.lane.b32.xlu0 %v717, 96
        %v1601 = vpop.permute.xlu0 %1600
        %v1602 = vmul.f32 %v613, %v1587
        %v1603 = vmul.f32 %v619, %v1589
        %v1604 = vmul.f32 %v625, %v1591
        %v1605 = vmul.f32 %v631, %v1593
        %1606 = vmatprep.subr.mxu0 0.0
        %1607 = vmatpush1.msra.mxu0 %v735
        %1608 = vmatprep.subr.mxu0 0.0
        %1609 = vmatpush1.msra.mxu0 %v734
        %1610 = vmatprep.subr.mxu0 0.0
        %1611 = vmatpush1.msra.mxu0 %v733
        %1612 = vmatprep.subr.mxu0 0.0
        %1613 = vmatpush1.msra.mxu0 %v732
        %1614 = vmatprep.subr.mxu0 0.0
        %1615 = vmatpush1.msra.mxu0 %v731
        %1616 = vmatprep.subr.mxu0 0.0
        %1617 = vmatpush1.msra.mxu0 %v730
        %1618 = vmatprep.subr.mxu0 0.0
        %1619 = vmatpush1.msra.mxu0 %v729
        %1620 = vmatprep.subr.mxu0 0.0
        %1621 = vmatpush1.msra.mxu0 %v728
        %1622 = vmatprep.subr.mxu0 0.0
        %1623 = vmatpush1.msra.mxu0 %v727
        %1624 = vmatprep.subr.mxu0 0.0
        %1625 = vmatpush1.msra.mxu0 %v726
        %1626 = vmatprep.subr.mxu0 0.0
        %1627 = vmatpush1.msra.mxu0 %v725
        %1628 = vmatprep.subr.mxu0 0.0
        %1629 = vmatpush1.msra.mxu0 %v724
        %1630 = vmatprep.subr.mxu0 0.0
        %1631 = vmatpush1.msra.mxu0 %v723
        %1632 = vmatprep.subr.mxu0 0.0
        %1633 = vmatpush1.msra.mxu0 %v722
        %1634 = vmatprep.subr.mxu0 0.0
        %1635 = vmatpush1.msra.mxu0 %v721
        %1636 = vmatprep.subr.mxu0 0.0
        %1637 = vmatpush1.msra.mxu0 %v720
        %1638 = vmatprep.subr.mxu0 0.0
        %1639 = vmatpush2.msra.mxu0 0.0
        %1640 = vmatprep.subr.mxu0 0.0
        %1641 = vmatpush2.msra.mxu0 0.0
        %1642 = vmatprep.subr.mxu0 0.0
        %1643 = vmatpush2.msra.mxu0 0.0
        %1644 = vmatprep.subr.mxu0 0.0
        %1645 = vmatpush2.msra.mxu0 0.0
        %1646 = vmatprep.subr.mxu0 0.0
        %1647 = vmatpush2.msra.mxu0 0.0
        %1648 = vmatprep.subr.mxu0 0.0
        %1649 = vmatpush2.msra.mxu0 0.0
        %1650 = vmatprep.subr.mxu0 0.0
        %1651 = vmatpush2.msra.mxu0 0.0
        %1652 = vmatprep.subr.mxu0 0.0
        %1653 = vmatpush2.msra.mxu0 0.0
        %1654 = vmatprep.subr.mxu0 0.0
        %1655 = vmatpush2.msra.mxu0 0.0
        %1656 = vmatprep.subr.mxu0 0.0
        %1657 = vmatpush2.msra.mxu0 0.0
        %1658 = vmatprep.subr.mxu0 0.0
        %1659 = vmatpush2.msra.mxu0 0.0
        %1660 = vmatprep.subr.mxu0 0.0
        %1661 = vmatpush2.msra.mxu0 0.0
        %1662 = vmatprep.subr.mxu0 0.0
        %1663 = vmatpush2.msra.mxu0 0.0
        %1664 = vmatprep.subr.mxu0 0.0
        %1665 = vmatpush2.msra.mxu0 0.0
        %1666 = vmatprep.subr.mxu0 0.0
        %1667 = vmatpush2.msra.mxu0 0.0
        %1668 = vmatprep.subr.mxu0 0.0
        %1669 = vmatpush2.msra.mxu0 0.0
        %1670 = vmatprep.mubr.f32.mxu0 0.0
        %1671 = vmatmul.mubr.f32.gmra.mxu0 %v1602
        %v1672 = vpop.f32.mrf.mxu0
        %v1673 = vadd.f32 0.0, %v1672
        %v1674 = vpop.f32.mrf.mxu0
        %1675 = vmatprep.mubr.f32.mxu0 0.0
        %1676 = vmatmul.mubr.f32.gmra.mxu0 %v1603
        %v1677 = vpop.f32.mrf.mxu0
        %v1678 = vadd.f32 0.0, %v1677
        %v1679 = vpop.f32.mrf.mxu0
        %1680 = vmatprep.mubr.f32.mxu0 0.0
        %1681 = vmatmul.mubr.f32.gmra.mxu0 %v1604
        %v1682 = vpop.f32.mrf.mxu0
        %v1683 = vadd.f32 0.0, %v1682
        %v1684 = vpop.f32.mrf.mxu0
        %1685 = vmatprep.mubr.f32.mxu0 0.0
        %1686 = vmatmul.mubr.f32.gmra.mxu0 %v1605
        %v1687 = vpop.f32.mrf.mxu0
        %v1688 = vadd.f32 0.0, %v1687
        %v1689 = vpop.f32.mrf.mxu0
        %1690 = vdwg.mxu0
        %v1691 = vmax.f32 %v1538, %v1673
        %v1692 = vmax.f32 %v1539, %v1678
        %v1693 = vmax.f32 %v1540, %v1683
        %v1694 = vmax.f32 %v1541, %v1688
        %v1695 = vsub.f32 %v1538, %v1691
        %v1696 = vsub.f32 %v1539, %v1692
        %v1697 = vsub.f32 %v1540, %v1693
        %v1698 = vsub.f32 %v1541, %v1694
        %v1699 = vmul.f32 %v1695, 1.442695
        %v1700 = vpow.pop %v1699
        %v1701 = vmul.f32 %v1696, 1.442695
        %v1702 = vpow.pop %v1701
        %v1703 = vmul.f32 %v1697, 1.442695
        %v1704 = vpow.pop %v1703
        %v1705 = vmul.f32 %v1698, 1.442695
        %v1706 = vpow.pop %v1705
        %v1707 = vsub.f32 %v1673, %v1691
        %v1708 = vsub.f32 %v1678, %v1692
        %v1709 = vsub.f32 %v1683, %v1693
        %v1710 = vsub.f32 %v1688, %v1694
        %v1711 = vmul.f32 %v1707, 1.442695
        %v1712 = vpow.pop %v1711
        %v1713 = vmul.f32 %v1708, 1.442695
        %v1714 = vpow.pop %v1713
        %v1715 = vmul.f32 %v1709, 1.442695
        %v1716 = vpow.pop %v1715
        %v1717 = vmul.f32 %v1710, 1.442695
        %v1718 = vpow.pop %v1717
        %v1719 = vmul.f32 %v1700, %v1570
        %v1720 = vmul.f32 %v1702, %v1571
        %v1721 = vmul.f32 %v1704, %v1572
        %v1722 = vmul.f32 %v1706, %v1573
        %v1723 = vadd.f32 %v1719, %v1712
        %v1724 = vadd.f32 %v1720, %v1714
        %v1725 = vadd.f32 %v1721, %v1716
        %v1726 = vadd.f32 %v1722, %v1718
        %v1727 = vmul.f32 %v1700, %v1582
        %v1728 = vmul.f32 %v1702, %v1583
        %v1729 = vmul.f32 %v1704, %v1584
        %v1730 = vmul.f32 %v1706, %v1585
        %v1731 = vmul.f32 %v1712, %v1595
        %v1732 = vmul.f32 %v1714, %v1597
        %v1733 = vmul.f32 %v1716, %v1599
        %v1734 = vmul.f32 %v1718, %v1601
        %v1735 = vadd.f32 %v1727, %v1731
        %v1736 = vadd.f32 %v1728, %v1732
        %v1737 = vadd.f32 %v1729, %v1733
        %v1738 = vadd.f32 %v1730, %v1734
        %1739 = vrot.lane.b32.xlu0 %v615, 112
        %v1740 = vpop.permute.xlu0 %1739
        %1741 = vrot.lane.b32.xlu0 %v621, 112
        %v1742 = vpop.permute.xlu0 %1741
        %1743 = vrot.lane.b32.xlu0 %v627, 112
        %v1744 = vpop.permute.xlu0 %1743
        %1745 = vrot.lane.b32.xlu0 %v633, 112
        %v1746 = vpop.permute.xlu0 %1745
        %1747 = vrot.lane.b32.xlu0 %v702, 112
        %v1748 = vpop.permute.xlu0 %1747
        %1749 = vrot.lane.b32.xlu0 %v707, 112
        %v1750 = vpop.permute.xlu0 %1749
        %1751 = vrot.lane.b32.xlu0 %v712, 112
        %v1752 = vpop.permute.xlu0 %1751
        %1753 = vrot.lane.b32.xlu0 %v717, 112
        %v1754 = vpop.permute.xlu0 %1753
        %v1755 = vmul.f32 %v613, %v1740
        %v1756 = vmul.f32 %v619, %v1742
        %v1757 = vmul.f32 %v625, %v1744
        %v1758 = vmul.f32 %v631, %v1746
        %1759 = vmatprep.subr.mxu0 0.0
        %1760 = vmatpush1.msra.mxu0 %v735
        %1761 = vmatprep.subr.mxu0 0.0
        %1762 = vmatpush1.msra.mxu0 %v734
        %1763 = vmatprep.subr.mxu0 0.0
        %1764 = vmatpush1.msra.mxu0 %v733
        %1765 = vmatprep.subr.mxu0 0.0
        %1766 = vmatpush1.msra.mxu0 %v732
        %1767 = vmatprep.subr.mxu0 0.0
        %1768 = vmatpush1.msra.mxu0 %v731
        %1769 = vmatprep.subr.mxu0 0.0
        %1770 = vmatpush1.msra.mxu0 %v730
        %1771 = vmatprep.subr.mxu0 0.0
        %1772 = vmatpush1.msra.mxu0 %v729
        %1773 = vmatprep.subr.mxu0 0.0
        %1774 = vmatpush1.msra.mxu0 %v728
        %1775 = vmatprep.subr.mxu0 0.0
        %1776 = vmatpush1.msra.mxu0 %v727
        %1777 = vmatprep.subr.mxu0 0.0
        %1778 = vmatpush1.msra.mxu0 %v726
        %1779 = vmatprep.subr.mxu0 0.0
        %1780 = vmatpush1.msra.mxu0 %v725
        %1781 = vmatprep.subr.mxu0 0.0
        %1782 = vmatpush1.msra.mxu0 %v724
        %1783 = vmatprep.subr.mxu0 0.0
        %1784 = vmatpush1.msra.mxu0 %v723
        %1785 = vmatprep.subr.mxu0 0.0
        %1786 = vmatpush1.msra.mxu0 %v722
        %1787 = vmatprep.subr.mxu0 0.0
        %1788 = vmatpush1.msra.mxu0 %v721
        %1789 = vmatprep.subr.mxu0 0.0
        %1790 = vmatpush1.msra.mxu0 %v720
        %1791 = vmatprep.subr.mxu0 0.0
        %1792 = vmatpush2.msra.mxu0 0.0
        %1793 = vmatprep.subr.mxu0 0.0
        %1794 = vmatpush2.msra.mxu0 0.0
        %1795 = vmatprep.subr.mxu0 0.0
        %1796 = vmatpush2.msra.mxu0 0.0
        %1797 = vmatprep.subr.mxu0 0.0
        %1798 = vmatpush2.msra.mxu0 0.0
        %1799 = vmatprep.subr.mxu0 0.0
        %1800 = vmatpush2.msra.mxu0 0.0
        %1801 = vmatprep.subr.mxu0 0.0
        %1802 = vmatpush2.msra.mxu0 0.0
        %1803 = vmatprep.subr.mxu0 0.0
        %1804 = vmatpush2.msra.mxu0 0.0
        %1805 = vmatprep.subr.mxu0 0.0
        %1806 = vmatpush2.msra.mxu0 0.0
        %1807 = vmatprep.subr.mxu0 0.0
        %1808 = vmatpush2.msra.mxu0 0.0
        %1809 = vmatprep.subr.mxu0 0.0
        %1810 = vmatpush2.msra.mxu0 0.0
        %1811 = vmatprep.subr.mxu0 0.0
        %1812 = vmatpush2.msra.mxu0 0.0
        %1813 = vmatprep.subr.mxu0 0.0
        %1814 = vmatpush2.msra.mxu0 0.0
        %1815 = vmatprep.subr.mxu0 0.0
        %1816 = vmatpush2.msra.mxu0 0.0
        %1817 = vmatprep.subr.mxu0 0.0
        %1818 = vmatpush2.msra.mxu0 0.0
        %1819 = vmatprep.subr.mxu0 0.0
        %1820 = vmatpush2.msra.mxu0 0.0
        %1821 = vmatprep.subr.mxu0 0.0
        %1822 = vmatpush2.msra.mxu0 0.0
        %1823 = vmatprep.mubr.f32.mxu0 0.0
        %1824 = vmatmul.mubr.f32.gmra.mxu0 %v1755
        %v1825 = vpop.f32.mrf.mxu0
        %v1826 = vadd.f32 0.0, %v1825
        %v1827 = vpop.f32.mrf.mxu0
        %1828 = vmatprep.mubr.f32.mxu0 0.0
        %1829 = vmatmul.mubr.f32.gmra.mxu0 %v1756
        %v1830 = vpop.f32.mrf.mxu0
        %v1831 = vadd.f32 0.0, %v1830
        %v1832 = vpop.f32.mrf.mxu0
        %1833 = vmatprep.mubr.f32.mxu0 0.0
        %1834 = vmatmul.mubr.f32.gmra.mxu0 %v1757
        %v1835 = vpop.f32.mrf.mxu0
        %v1836 = vadd.f32 0.0, %v1835
        %v1837 = vpop.f32.mrf.mxu0
        %1838 = vmatprep.mubr.f32.mxu0 0.0
        %1839 = vmatmul.mubr.f32.gmra.mxu0 %v1758
        %v1840 = vpop.f32.mrf.mxu0
        %v1841 = vadd.f32 0.0, %v1840
        %v1842 = vpop.f32.mrf.mxu0
        %1843 = vdwg.mxu0
        %v1844 = vmax.f32 %v1691, %v1826
        %v1845 = vmax.f32 %v1692, %v1831
        %v1846 = vmax.f32 %v1693, %v1836
        %v1847 = vmax.f32 %v1694, %v1841
        %v1848 = vsub.f32 %v1691, %v1844
        %v1849 = vsub.f32 %v1692, %v1845
        %v1850 = vsub.f32 %v1693, %v1846
        %v1851 = vsub.f32 %v1694, %v1847
        %v1852 = vmul.f32 %v1848, 1.442695
        %v1853 = vpow.pop %v1852
        %v1854 = vmul.f32 %v1849, 1.442695
        %v1855 = vpow.pop %v1854
        %v1856 = vmul.f32 %v1850, 1.442695
        %v1857 = vpow.pop %v1856
        %v1858 = vmul.f32 %v1851, 1.442695
        %v1859 = vpow.pop %v1858
        %v1860 = vsub.f32 %v1826, %v1844
        %v1861 = vsub.f32 %v1831, %v1845
        %v1862 = vsub.f32 %v1836, %v1846
        %v1863 = vsub.f32 %v1841, %v1847
        %v1864 = vmul.f32 %v1860, 1.442695
        %v1865 = vpow.pop %v1864
        %v1866 = vmul.f32 %v1861, 1.442695
        %v1867 = vpow.pop %v1866
        %v1868 = vmul.f32 %v1862, 1.442695
        %v1869 = vpow.pop %v1868
        %v1870 = vmul.f32 %v1863, 1.442695
        %v1871 = vpow.pop %v1870
        %v1872 = vmul.f32 %v1853, %v1723
        %v1873 = vmul.f32 %v1855, %v1724
        %v1874 = vmul.f32 %v1857, %v1725
        %v1875 = vmul.f32 %v1859, %v1726
        %v1876 = vadd.f32 %v1872, %v1865
        %v1877 = vadd.f32 %v1873, %v1867
        %v1878 = vadd.f32 %v1874, %v1869
        %v1879 = vadd.f32 %v1875, %v1871
        %v1880 = vmul.f32 %v1853, %v1735
        %v1881 = vmul.f32 %v1855, %v1736
        %v1882 = vmul.f32 %v1857, %v1737
        %v1883 = vmul.f32 %v1859, %v1738
        %v1884 = vmul.f32 %v1865, %v1748
        %v1885 = vmul.f32 %v1867, %v1750
        %v1886 = vmul.f32 %v1869, %v1752
        %v1887 = vmul.f32 %v1871, %v1754
        %v1888 = vadd.f32 %v1880, %v1884
        %v1889 = vadd.f32 %v1881, %v1885
        %v1890 = vadd.f32 %v1882, %v1886
        %v1891 = vadd.f32 %v1883, %v1887
        %v1892 = vrcp.pop %v1876
        %v1893 = vrcp.pop %v1877
        %v1894 = vrcp.pop %v1878
        %v1895 = vrcp.pop %v1879
        %v1896 = vmul.f32 %v1888, %v1892
        %v1897 = vmul.f32 %v1889, %v1893
        %v1898 = vmul.f32 %v1890, %v1894
        %v1899 = vmul.f32 %v1891, %v1895
        %v1900 = vld [vmem:[#allocation7] sm:$0xff]
        %v1901 = vld [vmem:[#allocation7 + $0x8] sm:$0xff]
        %v1902 = vld [vmem:[#allocation7 + $0x10] sm:$0xff]
        %v1903 = vld [vmem:[#allocation7 + $0x18] sm:$0xff]
        %v1904 = vld [vmem:[#allocation7 + $0x20] sm:$0xff]
        %v1905 = vld [vmem:[#allocation7 + $0x28] sm:$0xff]
        %v1906 = vld [vmem:[#allocation7 + $0x30] sm:$0xff]
        %v1907 = vld [vmem:[#allocation7 + $0x38] sm:$0xff]
        %v1908 = vld [vmem:[#allocation7 + $0x40] sm:$0xff]
        %v1909 = vld [vmem:[#allocation7 + $0x48] sm:$0xff]
        %v1910 = vld [vmem:[#allocation7 + $0x50] sm:$0xff]
        %v1911 = vld [vmem:[#allocation7 + $0x58] sm:$0xff]
        %v1912 = vld [vmem:[#allocation7 + $0x60] sm:$0xff]
        %v1913 = vld [vmem:[#allocation7 + $0x68] sm:$0xff]
        %v1914 = vld [vmem:[#allocation7 + $0x70] sm:$0xff]
        %v1915 = vld [vmem:[#allocation7 + $0x78] sm:$0xff]
        %v1916 = vld [vmem:[%s5] sm:$0x1]
        %v1918 = vlaneseq
        %v1919 = vshrl.u32 %v1918, 7
        %v1920 = vsub.s32 0, %v1919
        %v1921 = vrot.slane %v1916, %v1920
        %1923 = vmatprep.subr.mxu0 0.0
        %1924 = vmatpush1.msra.mxu0 %v1915
        %1925 = vmatprep.subr.mxu0 0.0
        %1926 = vmatpush1.msra.mxu0 %v1914
        %1927 = vmatprep.subr.mxu0 0.0
        %1928 = vmatpush1.msra.mxu0 %v1913
        %1929 = vmatprep.subr.mxu0 0.0
        %1930 = vmatpush1.msra.mxu0 %v1912
        %1931 = vmatprep.subr.mxu0 0.0
        %1932 = vmatpush1.msra.mxu0 %v1911
        %1933 = vmatprep.subr.mxu0 0.0
        %1934 = vmatpush1.msra.mxu0 %v1910
        %1935 = vmatprep.subr.mxu0 0.0
        %1936 = vmatpush1.msra.mxu0 %v1909
        %1937 = vmatprep.subr.mxu0 0.0
        %1938 = vmatpush1.msra.mxu0 %v1908
        %1939 = vmatprep.subr.mxu0 0.0
        %1940 = vmatpush1.msra.mxu0 %v1907
        %1941 = vmatprep.subr.mxu0 0.0
        %1942 = vmatpush1.msra.mxu0 %v1906
        %1943 = vmatprep.subr.mxu0 0.0
        %1944 = vmatpush1.msra.mxu0 %v1905
        %1945 = vmatprep.subr.mxu0 0.0
        %1946 = vmatpush1.msra.mxu0 %v1904
        %1947 = vmatprep.subr.mxu0 0.0
        %1948 = vmatpush1.msra.mxu0 %v1903
        %1949 = vmatprep.subr.mxu0 0.0
        %1950 = vmatpush1.msra.mxu0 %v1902
        %1951 = vmatprep.subr.mxu0 0.0
        %1952 = vmatpush1.msra.mxu0 %v1901
        %1953 = vmatprep.subr.mxu0 0.0
        %1954 = vmatpush1.msra.mxu0 %v1900
        %1955 = vmatprep.subr.mxu0 0.0
        %1956 = vmatpush2.msra.mxu0 0.0
        %1957 = vmatprep.subr.mxu0 0.0
        %1958 = vmatpush2.msra.mxu0 0.0
        %1959 = vmatprep.subr.mxu0 0.0
        %1960 = vmatpush2.msra.mxu0 0.0
        %1961 = vmatprep.subr.mxu0 0.0
        %1962 = vmatpush2.msra.mxu0 0.0
        %1963 = vmatprep.subr.mxu0 0.0
        %1964 = vmatpush2.msra.mxu0 0.0
        %1965 = vmatprep.subr.mxu0 0.0
        %1966 = vmatpush2.msra.mxu0 0.0
        %1967 = vmatprep.subr.mxu0 0.0
        %1968 = vmatpush2.msra.mxu0 0.0
        %1969 = vmatprep.subr.mxu0 0.0
        %1970 = vmatpush2.msra.mxu0 0.0
        %1971 = vmatprep.subr.mxu0 0.0
        %1972 = vmatpush2.msra.mxu0 0.0
        %1973 = vmatprep.subr.mxu0 0.0
        %1974 = vmatpush2.msra.mxu0 0.0
        %1975 = vmatprep.subr.mxu0 0.0
        %1976 = vmatpush2.msra.mxu0 0.0
        %1977 = vmatprep.subr.mxu0 0.0
        %1978 = vmatpush2.msra.mxu0 0.0
        %1979 = vmatprep.subr.mxu0 0.0
        %1980 = vmatpush2.msra.mxu0 0.0
        %1981 = vmatprep.subr.mxu0 0.0
        %1982 = vmatpush2.msra.mxu0 0.0
        %1983 = vmatprep.subr.mxu0 0.0
        %1984 = vmatpush2.msra.mxu0 0.0
        %1985 = vmatprep.subr.mxu0 0.0
        %1986 = vmatpush2.msra.mxu0 0.0
        %1987 = vmatprep.mubr.f32.mxu0 0.0
        %1988 = vmatmul.mubr.f32.gmra.mxu0 %v1896
        %v1989 = vpop.f32.mrf.mxu0
        %v1990 = vadd.f32 %v1921, %v1989
        %v1991 = vpop.f32.mrf.mxu0
        %1992 = vmatprep.mubr.f32.mxu0 0.0
        %1993 = vmatmul.mubr.f32.gmra.mxu0 %v1897
        %v1994 = vpop.f32.mrf.mxu0
        %v1995 = vadd.f32 %v1921, %v1994
        %v1996 = vpop.f32.mrf.mxu0
        %1997 = vmatprep.mubr.f32.mxu0 0.0
        %1998 = vmatmul.mubr.f32.gmra.mxu0 %v1898
        %v1999 = vpop.f32.mrf.mxu0
        %v2000 = vadd.f32 %v1921, %v1999
        %v2001 = vpop.f32.mrf.mxu0
        %2002 = vmatprep.mubr.f32.mxu0 0.0
        %2003 = vmatmul.mubr.f32.gmra.mxu0 %v1899
        %v2004 = vpop.f32.mrf.mxu0
        %v2005 = vadd.f32 %v1921, %v2004
        %v2006 = vpop.f32.mrf.mxu0
        %2007 = vdwg.mxu0
        %2008 = vst [vmem:[%s289] sm:$0xff] %v1990
        %2009 = vst [vmem:[%s289 + $0x8] sm:$0xff] %v1995
        %2010 = vst [vmem:[%s289 + $0x10] sm:$0xff] %v2000
        %2011 = vst [vmem:[%s289 + $0x18] sm:$0xff] %v2005
        %s2012 = sand.u32 %s161, 1
        %s2013 = scalar_lea.sflag [#allocation4], %s2012
        %s2014 = sand.u32 %s161, 1
        %s2015 = smul.addr %s2014, 32
        %s2016 = scalar_lea.vmem [#allocation8], %s2015
        // Predicated region
        $region57: #{tpu_custom_call.1} parent=43 // pred_check
          %p2017 = pneg %p171
        $region58: #{tpu_custom_call.1} parent=43 // pred_check_branch
          %2019 = sbr.rel (%p2017) target = $region60
        $region59: #{tpu_custom_call.1} parent=43 // pred_region
          %s2020 = smul.u32 4, %s22
          %s2022 = ssub.s32 512, 512
          %2023 = vsyncadd %s2013, %s2022
          %s2024 = smul.addr %s2020, 128
          %s2025 = scalar_lea.hbm %s6, %s2024
          %s2026 = sshll.u32 %s2016, 4
          %s2027 = int_to_ptr.vmem [resolvable:$true] %s2026
          %2032 = dma.vmem_to_hbm [thread:$0]  %s2027, 512, %s2025, %s2013, 128, 128, 8
        $region60: #{tpu_custom_call.1} parent=43 // pred_fallthru
          _
      $region44: #{tpu_custom_call.1} parent=5 // pred_fallthru
        _
      %p2033 = scmp.le.s32.totalorder 2, %s17
      // Predicated region
      $region61: #{tpu_custom_call.1} parent=5 // pred_check
        %p2034 = pneg %p2033
      $region62: #{tpu_custom_call.1} parent=5 // pred_check_branch
        %2036 = sbr.rel (%p2034) target = $region64
      $region63: #{tpu_custom_call.1} parent=5 // pred_region
        %s2037 = ssub.s32 %s17, 2
        // Predicated region
        $region65: #{tpu_custom_call.1} parent=63 // pred_check
          %p2038 = pneg %p177
        $region66: #{tpu_custom_call.1} parent=63 // pred_check_branch
          %2040 = sbr.rel (%p2038) target = $region68
        $region67: #{tpu_custom_call.1} parent=63 // pred_region
          %s2041 = sand.u32 %s162, 1
          %s2042 = scalar_lea.sflag [#allocation4], %s2041
          %s2043 = sand.u32 %s162, 1
          %s2044 = smul.addr %s2043, 32
          %s2045 = scalar_lea.vmem [#allocation8], %s2044
          %2046 = dma.done %s2042, 512
        $region68: #{tpu_custom_call.1} parent=63 // pred_fallthru
          _
      $region64: #{tpu_custom_call.1} parent=5 // pred_fallthru
        _
    $region6: #{tpu_custom_call.1} parent=1 // loop_footer
      %s21 = sadd.s32 1, %s17
    $region7: #{tpu_custom_call.1} parent=1 // loop_footer_branch
      %16 = sbr.rel target = $region3
    $region8: #{tpu_custom_call.1} parent=1 // loop_exit
      _
    %2047 = vsyncpa [#allocation3], 1
    %s2048 = scalar_lea.sflag [#allocation3], 1
    %2049 = vsyncpa %s2048, 1
    %2050 = vsyncpa [#allocation6], 1
    %2051 = vsyncpa [#allocation4], 1
    %s2052 = scalar_lea.sflag [#allocation4], 1
    %2053 = vsyncpa %s2052, 1

</llo_original>
